<compile_context>
chip_gen: v5e
topology: v5e:2x2
jax: 0.10.0
libtpu: 0.0.40
codegen_flags: <defaults>
</compile_context>

<pallas_src>
import functools

import jax
import jax.numpy as jnp
from jax.experimental import pallas as pl
from jax.experimental.pallas import tpu as pltpu

HIDDEN = 100        # logical hidden width (matches the PyTorch module)
HP = 128            # hidden width padded to the TPU lane width
OUT_PAD = 8         # final output width padded to a sublane group
LEAKY_SLOPE = 0.01  # torch.nn.LeakyReLU default negative_slope

MAX_SINGLE_TILE = 4096  # per-grid-step batch cap: ~<6 MiB live activations


def _leaky_relu(x):
    return jnp.where(x > 0, x, jnp.asarray(LEAKY_SLOPE, x.dtype) * x)


def _tpu_config():
    """(tensorcores_per_chip, has_bf16_vpu) derived from the device kind."""
    try:
        kind = jax.devices()[0].device_kind.lower()
    except Exception:  # pragma: no cover - CPU/interpret fallbacks
        kind = ""
    is_v7 = ("v7" in kind) or ("7x" in kind)
    has_bf16_vpu = is_v7 or ("v6" in kind)
    num_cores = 2 if is_v7 else 1
    return num_cores, has_bf16_vpu


def _choose_tiling(batch, tm_max, num_cores):
    """Pick (tm, num_tiles, padded_batch): collapse small batches to one tile
    per TensorCore, otherwise use large tiles to amortize per-step overhead."""
    b128 = pl.cdiv(batch, 128) * 128
    if b128 <= num_cores * MAX_SINGLE_TILE:
        num_tiles = max(num_cores, pl.cdiv(b128, MAX_SINGLE_TILE))
        tm = pl.cdiv(b128, num_tiles * 128) * 128
        num_tiles = pl.cdiv(b128, tm)
    else:
        tm = pl.cdiv(min(max(tm_max, 128), MAX_SINGLE_TILE), 128) * 128
        num_tiles = pl.cdiv(b128, tm)
    if num_cores > 1 and num_tiles % num_cores != 0:
        num_tiles += num_cores - (num_tiles % num_cores)  # balance the 2 TCs
    return tm, num_tiles, num_tiles * tm


def mlp_kernel(xt_ref,
               w1_ref, b1_ref,
               w2_ref, b2_ref,
               w3_ref, b3_ref,
               w4_ref, b4_ref,
               o_ref,
               *, acc_dtype):
    # xt_ref: (2, tm) f32 -- batch on lanes.
    # w1:(HP,2) f32, b1..b4 f32; w2/w3:(HP,HP), w4:(OUT_PAD,HP) in matmul dtype.
    # acc_dtype: dtype of the layer-2/3 epilogue (bf16 on chips with a bf16 VPU).
    x0 = xt_ref[0:1, :]                       # (1, tm)
    x1 = xt_ref[1:2, :]                       # (1, tm)

    # Layer 1: K=2 is too shallow for the MXU -> two broadcast FMAs on the VPU (f32).
    h = w1_ref[:, 0:1] * x0 + w1_ref[:, 1:2] * x1 + b1_ref[...]   # (HP, tm) f32
    h = _leaky_relu(h).astype(w2_ref.dtype)

    # Layers 2-3: 128x128 MXU matmuls; epilogue (bias + LeakyReLU) in acc_dtype.
    h = jnp.dot(w2_ref[...], h, preferred_element_type=acc_dtype)
    h = _leaky_relu(h + b2_ref[...].astype(acc_dtype)).astype(w3_ref.dtype)

    h = jnp.dot(w3_ref[...], h, preferred_element_type=acc_dtype)
    h = _leaky_relu(h + b3_ref[...].astype(acc_dtype)).astype(w4_ref.dtype)

    # Layer 4: (OUT_PAD, HP) @ (HP, tm); only row 0 carries the real output.
    # TODO(synk): if this skinny dot streams like a full layer, replace it with
    #   a VPU multiply + cross-sublane (XLU) reduce producing (1, tm) directly.
    y = jnp.dot(w4_ref[...], h, preferred_element_type=jnp.float32) + b4_ref[...]
    o_ref[...] = y[0:1, :].astype(o_ref.dtype)                     # lane-dense (1, tm)


def _pad_kernel_params(params, matmul_dtype):
    """Zero-pad PyTorch-layout params to TPU-friendly shapes (pads stay exactly 0)."""
    w1 = jnp.zeros((HP, 2), jnp.float32).at[:HIDDEN, :].set(params["w1"])
    b1 = jnp.zeros((HP, 1), jnp.float32).at[:HIDDEN, 0].set(params["b1"])
    w2 = (jnp.zeros((HP, HP), jnp.float32)
          .at[:HIDDEN, :HIDDEN].set(params["w2"]).astype(matmul_dtype))
    b2 = jnp.zeros((HP, 1), jnp.float32).at[:HIDDEN, 0].set(params["b2"])
    w3 = (jnp.zeros((HP, HP), jnp.float32)
          .at[:HIDDEN, :HIDDEN].set(params["w3"]).astype(matmul_dtype))
    b3 = jnp.zeros((HP, 1), jnp.float32).at[:HIDDEN, 0].set(params["b3"])
    w4 = (jnp.zeros((OUT_PAD, HP), jnp.float32)
          .at[0, :HIDDEN].set(params["w4"][0]).astype(matmul_dtype))
    b4 = jnp.zeros((OUT_PAD, 1), jnp.float32).at[0, 0].set(params["b4"][0])
    return w1, b1, w2, b2, w3, b3, w4, b4


@functools.partial(jax.jit,
                   static_argnames=("tm", "matmul_dtype", "num_cores", "bf16_elementwise"))
def _forward_impl(x, params, *, tm, matmul_dtype, num_cores, bf16_elementwise):
    B, in_dim = x.shape
    assert in_dim == 2
    mm_dtype = jnp.dtype(matmul_dtype)

    tm_eff, num_tiles, b_pad = _choose_tiling(B, tm, num_cores)

    # Put the batch on the lane axis, zero-padded to num_tiles * tm_eff.
    xt = jnp.pad(x.astype(jnp.float32), ((0, b_pad - B), (0, 0))).T   # (2, b_pad)

    kparams = _pad_kernel_params(params, mm_dtype)

    acc_dtype = jnp.bfloat16 if (bf16_elementwise and mm_dtype == jnp.bfloat16) else jnp.float32
    kernel = functools.partial(mlp_kernel, acc_dtype=acc_dtype)

    def full(p):
        return pl.BlockSpec(p.shape, lambda i: (0,) * p.ndim)

    flops_per_row = 2 * 2 * HP + 2 * (2 * HP * HP) + 2 * HP * OUT_PAD
    param_bytes = sum(int(p.size) * p.dtype.itemsize for p in kparams)
    cost = pl.CostEstimate(
        flops=int(b_pad * flops_per_row),
        transcendentals=0,
        bytes_accessed=int(b_pad * 3 * 4 + param_bytes),
    )

    # v7x: actually shard the batch grid axis across the 2 TensorCores.
    dim_sem = (pltpu.CORE_PARALLEL,) if num_cores > 1 else ("parallel",)

    out = pl.pallas_call(
        kernel,
        out_shape=jax.ShapeDtypeStruct((num_tiles, 1, tm_eff), jnp.float32),
        grid_spec=pltpu.PrefetchScalarGridSpec(
            num_scalar_prefetch=0,
            grid=(num_tiles,),
            in_specs=[pl.BlockSpec((2, tm_eff), lambda i: (0, i))]   # x tile, batch on lanes
                     + [full(p) for p in kparams],                   # grid-invariant weights
            # Lane-dense output row per batch tile.
            out_specs=pl.BlockSpec((None, 1, tm_eff), lambda i: (i, 0, 0)),
        ),
        compiler_params=pltpu.CompilerParams(
            dimension_semantics=dim_sem,
            vmem_limit_bytes=32 * 1024 * 1024,   # safe on v5e(128MiB)/v6e(128MiB)/v7x(64MiB)
        ),
        cost_estimate=cost,
    )(xt, *kparams)

    # (num_tiles, 1, tm_eff) -> (B, 1), dropping the pad rows.
    return out.reshape(-1)[:B].reshape(B, 1)


def neural_model_forward(x, params, *, tm=1024, matmul_dtype=jnp.bfloat16):
    """x: (B, 2) float32. params: PyTorch-layout weights (out,in) / biases (out,).

    matmul_dtype=jnp.float32 is the exact-parity validated path; bf16 is the
    fast path (MXU-native weights, f32 accumulation)."""
    num_cores, has_bf16_vpu = _tpu_config()
    return _forward_impl(
        x, params,
        tm=int(tm),
        matmul_dtype=jnp.dtype(matmul_dtype).name,
        num_cores=num_cores,
        bf16_elementwise=bool(has_bf16_vpu),
    )


def init_params(key):
    """PyTorch nn.Linear default init: U(-1/sqrt(fan_in), +1/sqrt(fan_in)).
    Weights stored PyTorch-style as (out_features, in_features); biases (out_features,)."""
    def linear(k, fan_in, fan_out):
        kw, kb = jax.random.split(k)
        bound = 1.0 / (fan_in ** 0.5)
        w = jax.random.uniform(kw, (fan_out, fan_in), jnp.float32, -bound, bound)
        b = jax.random.uniform(kb, (fan_out,), jnp.float32, -bound, bound)
        return w, b

    k1, k2, k3, k4 = jax.random.split(key, 4)
    w1, b1 = linear(k1, 2, HIDDEN)
    w2, b2 = linear(k2, HIDDEN, HIDDEN)
    w3, b3 = linear(k3, HIDDEN, HIDDEN)
    w4, b4 = linear(k4, HIDDEN, 1)
    return dict(w1=w1, b1=b1, w2=w2, b2=b2, w3=w3, b3=b3, w4=w4, b4=b4)


def reference_forward(x, params):
    """Pure-JAX f32 reference matching the PyTorch module exactly."""
    h = _leaky_relu(x @ params["w1"].T + params["b1"])
    h = _leaky_relu(h @ params["w2"].T + params["b2"])
    h = _leaky_relu(h @ params["w3"].T + params["b3"])
    return h @ params["w4"].T + params["b4"]


if __name__ == "__main__":
    key = jax.random.PRNGKey(0)
    k_params, k_x = jax.random.split(key)

    params = init_params(k_params)

    # Small demo batch: not a multiple of 128 (exercises padding) and small
    # enough to take the collapsed single-tile-per-core path.
    B = 300
    x = jax.random.normal(k_x, (B, 2), jnp.float32)

    ref = reference_forward(x, params)

    # Validated path: f32 matmuls -> exact parity with the PyTorch/f32 reference.
    out_f32 = jax.block_until_ready(
        neural_model_forward(x, params, matmul_dtype=jnp.float32))
    assert out_f32.shape == (B, 1)
    err_f32 = float(jnp.max(jnp.abs(out_f32 - ref)))
    assert jnp.allclose(out_f32, ref, atol=1e-4, rtol=1e-4), f"f32 max abs err {err_f32}"

    # Fast path: bf16 MXU weights (+ bf16 epilogue on v6e/v7x), relaxed tolerance.
    out_bf16 = jax.block_until_ready(
        neural_model_forward(x, params, matmul_dtype=jnp.bfloat16))
    assert out_bf16.shape == (B, 1)
    err_bf16 = float(jnp.max(jnp.abs(out_bf16 - ref)))
    assert jnp.allclose(out_bf16, ref, atol=5e-2, rtol=5e-2), f"bf16 max abs err {err_bf16}"

    print("KERNEL_OK")
</pallas_src>

<mosaic_0001>
module attributes {stable_mosaic.version = 11 : i64} {
  func.func @mlp_kernel(%arg0: i32, %arg1: memref<2x384xf32, #tpu.memory_space<vmem>>, %arg2: memref<128x2xf32, #tpu.memory_space<vmem>>, %arg3: memref<128x1xf32, #tpu.memory_space<vmem>>, %arg4: memref<128x128xf32, #tpu.memory_space<vmem>>, %arg5: memref<128x1xf32, #tpu.memory_space<vmem>>, %arg6: memref<128x128xf32, #tpu.memory_space<vmem>>, %arg7: memref<128x1xf32, #tpu.memory_space<vmem>>, %arg8: memref<8x128xf32, #tpu.memory_space<vmem>>, %arg9: memref<8x1xf32, #tpu.memory_space<vmem>>, %arg10: memref<1x1x384xf32, #tpu.memory_space<vmem>>) attributes {dimension_semantics = [#tpu.dimension_semantics<parallel>], iteration_bounds = array<i64: 1>, scalar_prefetch = 0 : i64, scratch_operands = 0 : i64, tpu.core_type = #tpu.core_type<tc>, window_params = [{transform_indices = @transform_0, window_bounds = array<i64: 2, 384>}, {pipeline_mode = #tpu.pipeline_mode<synchronous>, transform_indices = @transform_1, window_bounds = array<i64: 128, 2>}, {pipeline_mode = #tpu.pipeline_mode<synchronous>, transform_indices = @transform_2, window_bounds = array<i64: 128, 1>}, {pipeline_mode = #tpu.pipeline_mode<synchronous>, transform_indices = @transform_3, window_bounds = array<i64: 128, 128>}, {pipeline_mode = #tpu.pipeline_mode<synchronous>, transform_indices = @transform_4, window_bounds = array<i64: 128, 1>}, {pipeline_mode = #tpu.pipeline_mode<synchronous>, transform_indices = @transform_5, window_bounds = array<i64: 128, 128>}, {pipeline_mode = #tpu.pipeline_mode<synchronous>, transform_indices = @transform_6, window_bounds = array<i64: 128, 1>}, {pipeline_mode = #tpu.pipeline_mode<synchronous>, transform_indices = @transform_7, window_bounds = array<i64: 8, 128>}, {pipeline_mode = #tpu.pipeline_mode<synchronous>, transform_indices = @transform_8, window_bounds = array<i64: 8, 1>}, {transform_indices = @transform_9, window_bounds = array<i64: 1, 1, 384>}]} {
    %c0 = arith.constant 0 : index
    %c0_0 = arith.constant 0 : index
    %0 = vector.load %arg1[%c0, %c0_0] : memref<2x384xf32, #tpu.memory_space<vmem>>, vector<1x384xf32>
    %c1 = arith.constant 1 : index
    %c0_1 = arith.constant 0 : index
    %1 = vector.load %arg1[%c1, %c0_1] : memref<2x384xf32, #tpu.memory_space<vmem>>, vector<1x384xf32>
    %c0_2 = arith.constant 0 : index
    %c0_3 = arith.constant 0 : index
    %2 = vector.load %arg2[%c0_2, %c0_3] : memref<128x2xf32, #tpu.memory_space<vmem>>, vector<128x1xf32>
    %3 = vector.broadcast %2 : vector<128x1xf32> to vector<128x384xf32>
    %4 = vector.broadcast %0 : vector<1x384xf32> to vector<128x384xf32>
    %5 = arith.mulf %3, %4 : vector<128x384xf32>
    %c0_4 = arith.constant 0 : index
    %c1_5 = arith.constant 1 : index
    %6 = vector.load %arg2[%c0_4, %c1_5] : memref<128x2xf32, #tpu.memory_space<vmem>>, vector<128x1xf32>
    %7 = vector.broadcast %6 : vector<128x1xf32> to vector<128x384xf32>
    %8 = vector.broadcast %1 : vector<1x384xf32> to vector<128x384xf32>
    %9 = arith.mulf %7, %8 : vector<128x384xf32>
    %10 = arith.addf %5, %9 : vector<128x384xf32>
    %c0_6 = arith.constant 0 : index
    %c0_7 = arith.constant 0 : index
    %11 = vector.load %arg3[%c0_6, %c0_7] : memref<128x1xf32, #tpu.memory_space<vmem>>, vector<128x1xf32>
    %12 = vector.broadcast %11 : vector<128x1xf32> to vector<128x384xf32>
    %13 = arith.addf %10, %12 : vector<128x384xf32>
    %cst = arith.constant 0.000000e+00 : f32
    %14 = vector.broadcast %cst : f32 to vector<128x384xf32>
    %15 = arith.cmpf ogt, %13, %14 : vector<128x384xf32>
    %cst_8 = arith.constant 0.00999999977 : f32
    %16 = vector.broadcast %cst_8 : f32 to vector<128x384xf32>
    %17 = arith.mulf %16, %13 : vector<128x384xf32>
    %18 = arith.select %15, %13, %17 : vector<128x384xi1>, vector<128x384xf32>
    %c0_9 = arith.constant 0 : index
    %c0_10 = arith.constant 0 : index
    %19 = vector.load %arg4[%c0_9, %c0_10] : memref<128x128xf32, #tpu.memory_space<vmem>>, vector<128x128xf32>
    %cst_11 = arith.constant dense<0.000000e+00> : vector<128x384xf32>
    %20 = tpu.matmul %19, %18, %cst_11 {dimension_numbers = #tpu.dot_dimension_numbers<[1], [0], [0], [1], [0, 0, 1, 1], [], []>} : vector<128x128xf32>, vector<128x384xf32>, vector<128x384xf32> -> vector<128x384xf32>
    %c0_12 = arith.constant 0 : index
    %c0_13 = arith.constant 0 : index
    %21 = vector.load %arg5[%c0_12, %c0_13] : memref<128x1xf32, #tpu.memory_space<vmem>>, vector<128x1xf32>
    %22 = vector.broadcast %21 : vector<128x1xf32> to vector<128x384xf32>
    %23 = arith.addf %20, %22 : vector<128x384xf32>
    %cst_14 = arith.constant 0.000000e+00 : f32
    %24 = vector.broadcast %cst_14 : f32 to vector<128x384xf32>
    %25 = arith.cmpf ogt, %23, %24 : vector<128x384xf32>
    %cst_15 = arith.constant 0.00999999977 : f32
    %26 = vector.broadcast %cst_15 : f32 to vector<128x384xf32>
    %27 = arith.mulf %26, %23 : vector<128x384xf32>
    %28 = arith.select %25, %23, %27 : vector<128x384xi1>, vector<128x384xf32>
    %c0_16 = arith.constant 0 : index
    %c0_17 = arith.constant 0 : index
    %29 = vector.load %arg6[%c0_16, %c0_17] : memref<128x128xf32, #tpu.memory_space<vmem>>, vector<128x128xf32>
    %cst_18 = arith.constant dense<0.000000e+00> : vector<128x384xf32>
    %30 = tpu.matmul %29, %28, %cst_18 {dimension_numbers = #tpu.dot_dimension_numbers<[1], [0], [0], [1], [0, 0, 1, 1], [], []>} : vector<128x128xf32>, vector<128x384xf32>, vector<128x384xf32> -> vector<128x384xf32>
    %c0_19 = arith.constant 0 : index
    %c0_20 = arith.constant 0 : index
    %31 = vector.load %arg7[%c0_19, %c0_20] : memref<128x1xf32, #tpu.memory_space<vmem>>, vector<128x1xf32>
    %32 = vector.broadcast %31 : vector<128x1xf32> to vector<128x384xf32>
    %33 = arith.addf %30, %32 : vector<128x384xf32>
    %cst_21 = arith.constant 0.000000e+00 : f32
    %34 = vector.broadcast %cst_21 : f32 to vector<128x384xf32>
    %35 = arith.cmpf ogt, %33, %34 : vector<128x384xf32>
    %cst_22 = arith.constant 0.00999999977 : f32
    %36 = vector.broadcast %cst_22 : f32 to vector<128x384xf32>
    %37 = arith.mulf %36, %33 : vector<128x384xf32>
    %38 = arith.select %35, %33, %37 : vector<128x384xi1>, vector<128x384xf32>
    %c0_23 = arith.constant 0 : index
    %c0_24 = arith.constant 0 : index
    %39 = vector.load %arg8[%c0_23, %c0_24] : memref<8x128xf32, #tpu.memory_space<vmem>>, vector<8x128xf32>
    %cst_25 = arith.constant dense<0.000000e+00> : vector<8x384xf32>
    %40 = tpu.matmul %39, %38, %cst_25 {dimension_numbers = #tpu.dot_dimension_numbers<[1], [0], [0], [1], [0, 0, 1, 1], [], []>} : vector<8x128xf32>, vector<128x384xf32>, vector<8x384xf32> -> vector<8x384xf32>
    %c0_26 = arith.constant 0 : index
    %c0_27 = arith.constant 0 : index
    %41 = vector.load %arg9[%c0_26, %c0_27] : memref<8x1xf32, #tpu.memory_space<vmem>>, vector<8x1xf32>
    %42 = vector.broadcast %41 : vector<8x1xf32> to vector<8x384xf32>
    %43 = arith.addf %40, %42 : vector<8x384xf32>
    %44 = vector.extract_strided_slice %43 {offsets = [0, 0], sizes = [1, 384], strides = [1, 1]} : vector<8x384xf32> to vector<1x384xf32>
    %c0_28 = arith.constant 0 : index
    %c0_29 = arith.constant 0 : index
    %c0_30 = arith.constant 0 : index
    %45 = vector.load %arg10[%c0_28, %c0_29, %c0_30] : memref<1x1x384xf32, #tpu.memory_space<vmem>>, vector<1x1x384xf32>
    %46 = vector.shape_cast %45 : vector<1x1x384xf32> to vector<1x384xf32>
    %47 = vector.shape_cast %44 : vector<1x384xf32> to vector<1x1x384xf32>
    tpu.vector_store %arg10[%c0_28, %c0_29, %c0_30], %47 {strides = array<i32>} : memref<1x1x384xf32, #tpu.memory_space<vmem>>, vector<1x1x384xf32>,
    return
  }
  func.func @transform_0(%arg0: i32) -> (i32, i32) {
    %c0_i32 = arith.constant 0 : i32
    %c0_i32_0 = arith.constant 0 : i32
    return %c0_i32, %arg0 : i32, i32
  }
  func.func @transform_1(%arg0: i32) -> (i32, i32) {
    %c0_i32 = arith.constant 0 : i32
    %c0_i32_0 = arith.constant 0 : i32
    %c0_i32_1 = arith.constant 0 : i32
    return %c0_i32, %c0_i32_0 : i32, i32
  }
  func.func @transform_2(%arg0: i32) -> (i32, i32) {
    %c0_i32 = arith.constant 0 : i32
    %c0_i32_0 = arith.constant 0 : i32
    %c0_i32_1 = arith.constant 0 : i32
    return %c0_i32, %c0_i32_0 : i32, i32
  }
  func.func @transform_3(%arg0: i32) -> (i32, i32) {
    %c0_i32 = arith.constant 0 : i32
    %c0_i32_0 = arith.constant 0 : i32
    %c0_i32_1 = arith.constant 0 : i32
    return %c0_i32, %c0_i32_0 : i32, i32
  }
  func.func @transform_4(%arg0: i32) -> (i32, i32) {
    %c0_i32 = arith.constant 0 : i32
    %c0_i32_0 = arith.constant 0 : i32
    %c0_i32_1 = arith.constant 0 : i32
    return %c0_i32, %c0_i32_0 : i32, i32
  }
  func.func @transform_5(%arg0: i32) -> (i32, i32) {
    %c0_i32 = arith.constant 0 : i32
    %c0_i32_0 = arith.constant 0 : i32
    %c0_i32_1 = arith.constant 0 : i32
    return %c0_i32, %c0_i32_0 : i32, i32
  }
  func.func @transform_6(%arg0: i32) -> (i32, i32) {
    %c0_i32 = arith.constant 0 : i32
    %c0_i32_0 = arith.constant 0 : i32
    %c0_i32_1 = arith.constant 0 : i32
    return %c0_i32, %c0_i32_0 : i32, i32
  }
  func.func @transform_7(%arg0: i32) -> (i32, i32) {
    %c0_i32 = arith.constant 0 : i32
    %c0_i32_0 = arith.constant 0 : i32
    %c0_i32_1 = arith.constant 0 : i32
    return %c0_i32, %c0_i32_0 : i32, i32
  }
  func.func @transform_8(%arg0: i32) -> (i32, i32) {
    %c0_i32 = arith.constant 0 : i32
    %c0_i32_0 = arith.constant 0 : i32
    %c0_i32_1 = arith.constant 0 : i32
    return %c0_i32, %c0_i32_0 : i32, i32
  }
  func.func @transform_9(%arg0: i32) -> (i32, i32, i32) {
    %c0_i32 = arith.constant 0 : i32
    %c0_i32_0 = arith.constant 0 : i32
    %c0_i32_1 = arith.constant 0 : i32
    return %arg0, %c0_i32, %c0_i32_0 : i32, i32, i32
  }
}

</mosaic_0001>

<llo_original>
// kernel: _forward_impl.1
$region0: #{_forward_impl.1}
  #allocation0 [shape = 'u32[]', space=smem, size = 0x4, offset = 0x4, fixed_abs, tag = 'smem constant byte address 0x4 - core index']
  #allocation1 [shape = 'u32[72,128]{1,0:T(1,128)}', space=vmem, size = 0x9000, scoped, tag = 'internal scratch']
  %s0 = inlined_call_operand.vmem [shape: f32[2,384], index: 0, kind: input, shape index: {}]
  %s1 = inlined_call_operand.vmem [shape: f32[128,2], index: 1, kind: input, shape index: {}]
  %s2 = inlined_call_operand.vmem [shape: f32[128,1], index: 2, kind: input, shape index: {}]
  %s3 = inlined_call_operand.vmem [shape: f32[128,128], index: 3, kind: input, shape index: {}]
  %s4 = inlined_call_operand.vmem [shape: f32[128,1], index: 4, kind: input, shape index: {}]
  %s5 = inlined_call_operand.vmem [shape: f32[128,128], index: 5, kind: input, shape index: {}]
  %s6 = inlined_call_operand.vmem [shape: f32[128,1], index: 6, kind: input, shape index: {}]
  %s7 = inlined_call_operand.vmem [shape: f32[8,128], index: 7, kind: input, shape index: {}]
  %s8 = inlined_call_operand.vmem [shape: f32[8,1], index: 8, kind: input, shape index: {}]
  %s9 = inlined_call_operand.vmem [shape: f32[1,1,384], index: 9, kind: output, shape index: {}]
  %s10 = sld [smem:[#allocation0]]
  $region46: #{_forward_impl.1} parent=0
    _
  %s12 = ssub.s32 1, %s10
  %s13 = scalar_select 0, %s12, %s10
  // Predicated region
  $region2: #{_forward_impl.1} parent=0 // pred_check
    _
  $region3: #{_forward_impl.1} parent=0 // pred_check_branch
    %15 = sbr.rel (0) target = $region5
  $region4: #{_forward_impl.1} parent=0 // pred_region
    _
  $region5: #{_forward_impl.1} parent=0 // pred_fallthru
    _
  // Predicated region
  $region6: #{_forward_impl.1} parent=0 // pred_check
    _
  $region7: #{_forward_impl.1} parent=0 // pred_check_branch
    %17 = sbr.rel (0) target = $region9
  $region8: #{_forward_impl.1} parent=0 // pred_region
    _
  $region9: #{_forward_impl.1} parent=0 // pred_fallthru
    _
  // Predicated region
  $region10: #{_forward_impl.1} parent=0 // pred_check
    _
  $region11: #{_forward_impl.1} parent=0 // pred_check_branch
    %19 = sbr.rel (0) target = $region13
  $region12: #{_forward_impl.1} parent=0 // pred_region
    _
  $region13: #{_forward_impl.1} parent=0 // pred_fallthru
    _
  // Predicated region
  $region14: #{_forward_impl.1} parent=0 // pred_check
    _
  $region15: #{_forward_impl.1} parent=0 // pred_check_branch
    %21 = sbr.rel (0) target = $region17
  $region16: #{_forward_impl.1} parent=0 // pred_region
    _
  $region17: #{_forward_impl.1} parent=0 // pred_fallthru
    _
  // Predicated region
  $region18: #{_forward_impl.1} parent=0 // pred_check
    _
  $region19: #{_forward_impl.1} parent=0 // pred_check_branch
    %23 = sbr.rel (0) target = $region21
  $region20: #{_forward_impl.1} parent=0 // pred_region
    _
  $region21: #{_forward_impl.1} parent=0 // pred_fallthru
    _
  // Predicated region
  $region22: #{_forward_impl.1} parent=0 // pred_check
    _
  $region23: #{_forward_impl.1} parent=0 // pred_check_branch
    %25 = sbr.rel (0) target = $region25
  $region24: #{_forward_impl.1} parent=0 // pred_region
    _
  $region25: #{_forward_impl.1} parent=0 // pred_fallthru
    _
  // Predicated region
  $region26: #{_forward_impl.1} parent=0 // pred_check
    _
  $region27: #{_forward_impl.1} parent=0 // pred_check_branch
    %27 = sbr.rel (0) target = $region29
  $region28: #{_forward_impl.1} parent=0 // pred_region
    _
  $region29: #{_forward_impl.1} parent=0 // pred_fallthru
    _
  // Predicated region
  $region30: #{_forward_impl.1} parent=0 // pred_check
    _
  $region31: #{_forward_impl.1} parent=0 // pred_check_branch
    %29 = sbr.rel (0) target = $region33
  $region32: #{_forward_impl.1} parent=0 // pred_region
    _
  $region33: #{_forward_impl.1} parent=0 // pred_fallthru
    _
  // Predicated region
  $region34: #{_forward_impl.1} parent=0 // pred_check
    _
  $region35: #{_forward_impl.1} parent=0 // pred_check_branch
    %31 = sbr.rel (0) target = $region37
  $region36: #{_forward_impl.1} parent=0 // pred_region
    _
  $region37: #{_forward_impl.1} parent=0 // pred_fallthru
    _
  %v32 = vld [vmem:[%s0] ss:$2 sm:$0x7]
  %s33 = scalar_lea.vmem %s0, 1
  %v34 = vld [vmem:[%s33] ss:$2 sm:$0x7]
  %v35 = vld [vmem:[%s1] sm:$0xff]
  %v36 = vld [vmem:[%s1 + $0x8] sm:$0xff]
  %v37 = vld [vmem:[%s1 + $0x10] sm:$0xff]
  %v38 = vld [vmem:[%s1 + $0x18] sm:$0xff]
  %v39 = vld [vmem:[%s1 + $0x20] sm:$0xff]
  %v40 = vld [vmem:[%s1 + $0x28] sm:$0xff]
  %v41 = vld [vmem:[%s1 + $0x30] sm:$0xff]
  %v42 = vld [vmem:[%s1 + $0x38] sm:$0xff]
  %v43 = vld [vmem:[%s1 + $0x40] sm:$0xff]
  %v44 = vld [vmem:[%s1 + $0x48] sm:$0xff]
  %v45 = vld [vmem:[%s1 + $0x50] sm:$0xff]
  %v46 = vld [vmem:[%s1 + $0x58] sm:$0xff]
  %v47 = vld [vmem:[%s1 + $0x60] sm:$0xff]
  %v48 = vld [vmem:[%s1 + $0x68] sm:$0xff]
  %v49 = vld [vmem:[%s1 + $0x70] sm:$0xff]
  %v50 = vld [vmem:[%s1 + $0x78] sm:$0xff]
  %52 = vset.pattern.permute.xlu0 0
  %53 = vperm.xlu0 %52, %v35
  %v54 = vpop.permute.xlu0 %53
  %57 = vset.pattern.permute.xlu0 0
  %58 = vperm.xlu0 %57, %v36
  %v59 = vpop.permute.xlu0 %58
  %62 = vset.pattern.permute.xlu0 0
  %63 = vperm.xlu0 %62, %v37
  %v64 = vpop.permute.xlu0 %63
  %67 = vset.pattern.permute.xlu0 0
  %68 = vperm.xlu0 %67, %v38
  %v69 = vpop.permute.xlu0 %68
  %72 = vset.pattern.permute.xlu0 0
  %73 = vperm.xlu0 %72, %v39
  %v74 = vpop.permute.xlu0 %73
  %77 = vset.pattern.permute.xlu0 0
  %78 = vperm.xlu0 %77, %v40
  %v79 = vpop.permute.xlu0 %78
  %82 = vset.pattern.permute.xlu0 0
  %83 = vperm.xlu0 %82, %v41
  %v84 = vpop.permute.xlu0 %83
  %87 = vset.pattern.permute.xlu0 0
  %88 = vperm.xlu0 %87, %v42
  %v89 = vpop.permute.xlu0 %88
  %92 = vset.pattern.permute.xlu0 0
  %93 = vperm.xlu0 %92, %v43
  %v94 = vpop.permute.xlu0 %93
  %97 = vset.pattern.permute.xlu0 0
  %98 = vperm.xlu0 %97, %v44
  %v99 = vpop.permute.xlu0 %98
  %102 = vset.pattern.permute.xlu0 0
  %103 = vperm.xlu0 %102, %v45
  %v104 = vpop.permute.xlu0 %103
  %107 = vset.pattern.permute.xlu0 0
  %108 = vperm.xlu0 %107, %v46
  %v109 = vpop.permute.xlu0 %108
  %112 = vset.pattern.permute.xlu0 0
  %113 = vperm.xlu0 %112, %v47
  %v114 = vpop.permute.xlu0 %113
  %117 = vset.pattern.permute.xlu0 0
  %118 = vperm.xlu0 %117, %v48
  %v119 = vpop.permute.xlu0 %118
  %122 = vset.pattern.permute.xlu0 0
  %123 = vperm.xlu0 %122, %v49
  %v124 = vpop.permute.xlu0 %123
  %127 = vset.pattern.permute.xlu0 0
  %128 = vperm.xlu0 %127, %v50
  %v129 = vpop.permute.xlu0 %128
  %v132 = vperm.slane %v32, 0
  %v133 = vperm.slane %v32, 1
  %v134 = vperm.slane %v32, 2
  %v138 = vmul.f32 %v54, %v132
  %v139 = vmul.f32 %v54, %v133
  %v140 = vmul.f32 %v54, %v134
  %v141 = vmul.f32 %v59, %v132
  %v142 = vmul.f32 %v59, %v133
  %v143 = vmul.f32 %v59, %v134
  %v144 = vmul.f32 %v64, %v132
  %v145 = vmul.f32 %v64, %v133
  %v146 = vmul.f32 %v64, %v134
  %v147 = vmul.f32 %v69, %v132
  %v148 = vmul.f32 %v69, %v133
  %v149 = vmul.f32 %v69, %v134
  %v150 = vmul.f32 %v74, %v132
  %v151 = vmul.f32 %v74, %v133
  %v152 = vmul.f32 %v74, %v134
  %v153 = vmul.f32 %v79, %v132
  %v154 = vmul.f32 %v79, %v133
  %v155 = vmul.f32 %v79, %v134
  %v156 = vmul.f32 %v84, %v132
  %v157 = vmul.f32 %v84, %v133
  %v158 = vmul.f32 %v84, %v134
  %v159 = vmul.f32 %v89, %v132
  %v160 = vmul.f32 %v89, %v133
  %v161 = vmul.f32 %v89, %v134
  %v162 = vmul.f32 %v94, %v132
  %v163 = vmul.f32 %v94, %v133
  %v164 = vmul.f32 %v94, %v134
  %v165 = vmul.f32 %v99, %v132
  %v166 = vmul.f32 %v99, %v133
  %v167 = vmul.f32 %v99, %v134
  %v168 = vmul.f32 %v104, %v132
  %v169 = vmul.f32 %v104, %v133
  %v170 = vmul.f32 %v104, %v134
  %v171 = vmul.f32 %v109, %v132
  %v172 = vmul.f32 %v109, %v133
  %v173 = vmul.f32 %v109, %v134
  %v174 = vmul.f32 %v114, %v132
  %v175 = vmul.f32 %v114, %v133
  %v176 = vmul.f32 %v114, %v134
  %v177 = vmul.f32 %v119, %v132
  %v178 = vmul.f32 %v119, %v133
  %v179 = vmul.f32 %v119, %v134
  %v180 = vmul.f32 %v124, %v132
  %v181 = vmul.f32 %v124, %v133
  %v182 = vmul.f32 %v124, %v134
  %v183 = vmul.f32 %v129, %v132
  %v184 = vmul.f32 %v129, %v133
  %v185 = vmul.f32 %v129, %v134
  %186 = vset.pattern.permute.xlu0 1
  %187 = vperm.xlu0 %186, %v35
  %v188 = vpop.permute.xlu0 %187
  %190 = vset.pattern.permute.xlu0 1
  %191 = vperm.xlu0 %190, %v36
  %v192 = vpop.permute.xlu0 %191
  %194 = vset.pattern.permute.xlu0 1
  %195 = vperm.xlu0 %194, %v37
  %v196 = vpop.permute.xlu0 %195
  %198 = vset.pattern.permute.xlu0 1
  %199 = vperm.xlu0 %198, %v38
  %v200 = vpop.permute.xlu0 %199
  %202 = vset.pattern.permute.xlu0 1
  %203 = vperm.xlu0 %202, %v39
  %v204 = vpop.permute.xlu0 %203
  %206 = vset.pattern.permute.xlu0 1
  %207 = vperm.xlu0 %206, %v40
  %v208 = vpop.permute.xlu0 %207
  %210 = vset.pattern.permute.xlu0 1
  %211 = vperm.xlu0 %210, %v41
  %v212 = vpop.permute.xlu0 %211
  %214 = vset.pattern.permute.xlu0 1
  %215 = vperm.xlu0 %214, %v42
  %v216 = vpop.permute.xlu0 %215
  %218 = vset.pattern.permute.xlu0 1
  %219 = vperm.xlu0 %218, %v43
  %v220 = vpop.permute.xlu0 %219
  %222 = vset.pattern.permute.xlu0 1
  %223 = vperm.xlu0 %222, %v44
  %v224 = vpop.permute.xlu0 %223
  %226 = vset.pattern.permute.xlu0 1
  %227 = vperm.xlu0 %226, %v45
  %v228 = vpop.permute.xlu0 %227
  %230 = vset.pattern.permute.xlu0 1
  %231 = vperm.xlu0 %230, %v46
  %v232 = vpop.permute.xlu0 %231
  %234 = vset.pattern.permute.xlu0 1
  %235 = vperm.xlu0 %234, %v47
  %v236 = vpop.permute.xlu0 %235
  %238 = vset.pattern.permute.xlu0 1
  %239 = vperm.xlu0 %238, %v48
  %v240 = vpop.permute.xlu0 %239
  %242 = vset.pattern.permute.xlu0 1
  %243 = vperm.xlu0 %242, %v49
  %v244 = vpop.permute.xlu0 %243
  %246 = vset.pattern.permute.xlu0 1
  %247 = vperm.xlu0 %246, %v50
  %v248 = vpop.permute.xlu0 %247
  %v251 = vperm.slane %v34, 0
  %v252 = vperm.slane %v34, 1
  %v253 = vperm.slane %v34, 2
  %v257 = vmul.f32 %v188, %v251
  %v258 = vmul.f32 %v188, %v252
  %v259 = vmul.f32 %v188, %v253
  %v260 = vmul.f32 %v192, %v251
  %v261 = vmul.f32 %v192, %v252
  %v262 = vmul.f32 %v192, %v253
  %v263 = vmul.f32 %v196, %v251
  %v264 = vmul.f32 %v196, %v252
  %v265 = vmul.f32 %v196, %v253
  %v266 = vmul.f32 %v200, %v251
  %v267 = vmul.f32 %v200, %v252
  %v268 = vmul.f32 %v200, %v253
  %v269 = vmul.f32 %v204, %v251
  %v270 = vmul.f32 %v204, %v252
  %v271 = vmul.f32 %v204, %v253
  %v272 = vmul.f32 %v208, %v251
  %v273 = vmul.f32 %v208, %v252
  %v274 = vmul.f32 %v208, %v253
  %v275 = vmul.f32 %v212, %v251
  %v276 = vmul.f32 %v212, %v252
  %v277 = vmul.f32 %v212, %v253
  %v278 = vmul.f32 %v216, %v251
  %v279 = vmul.f32 %v216, %v252
  %v280 = vmul.f32 %v216, %v253
  %v281 = vmul.f32 %v220, %v251
  %v282 = vmul.f32 %v220, %v252
  %v283 = vmul.f32 %v220, %v253
  %v284 = vmul.f32 %v224, %v251
  %v285 = vmul.f32 %v224, %v252
  %v286 = vmul.f32 %v224, %v253
  %v287 = vmul.f32 %v228, %v251
  %v288 = vmul.f32 %v228, %v252
  %v289 = vmul.f32 %v228, %v253
  %v290 = vmul.f32 %v232, %v251
  %v291 = vmul.f32 %v232, %v252
  %v292 = vmul.f32 %v232, %v253
  %v293 = vmul.f32 %v236, %v251
  %v294 = vmul.f32 %v236, %v252
  %v295 = vmul.f32 %v236, %v253
  %v296 = vmul.f32 %v240, %v251
  %v297 = vmul.f32 %v240, %v252
  %v298 = vmul.f32 %v240, %v253
  %v299 = vmul.f32 %v244, %v251
  %v300 = vmul.f32 %v244, %v252
  %v301 = vmul.f32 %v244, %v253
  %v302 = vmul.f32 %v248, %v251
  %v303 = vmul.f32 %v248, %v252
  %v304 = vmul.f32 %v248, %v253
  %v305 = vadd.f32 %v138, %v257
  %v306 = vadd.f32 %v139, %v258
  %v307 = vadd.f32 %v140, %v259
  %v308 = vadd.f32 %v141, %v260
  %v309 = vadd.f32 %v142, %v261
  %v310 = vadd.f32 %v143, %v262
  %v311 = vadd.f32 %v144, %v263
  %v312 = vadd.f32 %v145, %v264
  %v313 = vadd.f32 %v146, %v265
  %v314 = vadd.f32 %v147, %v266
  %v315 = vadd.f32 %v148, %v267
  %v316 = vadd.f32 %v149, %v268
  %v317 = vadd.f32 %v150, %v269
  %v318 = vadd.f32 %v151, %v270
  %v319 = vadd.f32 %v152, %v271
  %v320 = vadd.f32 %v153, %v272
  %v321 = vadd.f32 %v154, %v273
  %v322 = vadd.f32 %v155, %v274
  %v323 = vadd.f32 %v156, %v275
  %v324 = vadd.f32 %v157, %v276
  %v325 = vadd.f32 %v158, %v277
  %v326 = vadd.f32 %v159, %v278
  %v327 = vadd.f32 %v160, %v279
  %v328 = vadd.f32 %v161, %v280
  %v329 = vadd.f32 %v162, %v281
  %v330 = vadd.f32 %v163, %v282
  %v331 = vadd.f32 %v164, %v283
  %v332 = vadd.f32 %v165, %v284
  %v333 = vadd.f32 %v166, %v285
  %v334 = vadd.f32 %v167, %v286
  %v335 = vadd.f32 %v168, %v287
  %v336 = vadd.f32 %v169, %v288
  %v337 = vadd.f32 %v170, %v289
  %v338 = vadd.f32 %v171, %v290
  %v339 = vadd.f32 %v172, %v291
  %v340 = vadd.f32 %v173, %v292
  %v341 = vadd.f32 %v174, %v293
  %v342 = vadd.f32 %v175, %v294
  %v343 = vadd.f32 %v176, %v295
  %v344 = vadd.f32 %v177, %v296
  %v345 = vadd.f32 %v178, %v297
  %v346 = vadd.f32 %v179, %v298
  %v347 = vadd.f32 %v180, %v299
  %v348 = vadd.f32 %v181, %v300
  %v349 = vadd.f32 %v182, %v301
  %v350 = vadd.f32 %v183, %v302
  %v351 = vadd.f32 %v184, %v303
  %v352 = vadd.f32 %v185, %v304
  %v353 = vld [vmem:[%s2] sm:$0xff]
  %v354 = vld [vmem:[%s2 + $0x8] sm:$0xff]
  %v355 = vld [vmem:[%s2 + $0x10] sm:$0xff]
  %v356 = vld [vmem:[%s2 + $0x18] sm:$0xff]
  %v357 = vld [vmem:[%s2 + $0x20] sm:$0xff]
  %v358 = vld [vmem:[%s2 + $0x28] sm:$0xff]
  %v359 = vld [vmem:[%s2 + $0x30] sm:$0xff]
  %v360 = vld [vmem:[%s2 + $0x38] sm:$0xff]
  %v361 = vld [vmem:[%s2 + $0x40] sm:$0xff]
  %v362 = vld [vmem:[%s2 + $0x48] sm:$0xff]
  %v363 = vld [vmem:[%s2 + $0x50] sm:$0xff]
  %v364 = vld [vmem:[%s2 + $0x58] sm:$0xff]
  %v365 = vld [vmem:[%s2 + $0x60] sm:$0xff]
  %v366 = vld [vmem:[%s2 + $0x68] sm:$0xff]
  %v367 = vld [vmem:[%s2 + $0x70] sm:$0xff]
  %v368 = vld [vmem:[%s2 + $0x78] sm:$0xff]
  %370 = vset.pattern.permute.xlu0 0
  %371 = vperm.xlu0 %370, %v353
  %v372 = vpop.permute.xlu0 %371
  %375 = vset.pattern.permute.xlu0 0
  %376 = vperm.xlu0 %375, %v354
  %v377 = vpop.permute.xlu0 %376
  %380 = vset.pattern.permute.xlu0 0
  %381 = vperm.xlu0 %380, %v355
  %v382 = vpop.permute.xlu0 %381
  %385 = vset.pattern.permute.xlu0 0
  %386 = vperm.xlu0 %385, %v356
  %v387 = vpop.permute.xlu0 %386
  %390 = vset.pattern.permute.xlu0 0
  %391 = vperm.xlu0 %390, %v357
  %v392 = vpop.permute.xlu0 %391
  %395 = vset.pattern.permute.xlu0 0
  %396 = vperm.xlu0 %395, %v358
  %v397 = vpop.permute.xlu0 %396
  %400 = vset.pattern.permute.xlu0 0
  %401 = vperm.xlu0 %400, %v359
  %v402 = vpop.permute.xlu0 %401
  %405 = vset.pattern.permute.xlu0 0
  %406 = vperm.xlu0 %405, %v360
  %v407 = vpop.permute.xlu0 %406
  %410 = vset.pattern.permute.xlu0 0
  %411 = vperm.xlu0 %410, %v361
  %v412 = vpop.permute.xlu0 %411
  %415 = vset.pattern.permute.xlu0 0
  %416 = vperm.xlu0 %415, %v362
  %v417 = vpop.permute.xlu0 %416
  %420 = vset.pattern.permute.xlu0 0
  %421 = vperm.xlu0 %420, %v363
  %v422 = vpop.permute.xlu0 %421
  %425 = vset.pattern.permute.xlu0 0
  %426 = vperm.xlu0 %425, %v364
  %v427 = vpop.permute.xlu0 %426
  %430 = vset.pattern.permute.xlu0 0
  %431 = vperm.xlu0 %430, %v365
  %v432 = vpop.permute.xlu0 %431
  %435 = vset.pattern.permute.xlu0 0
  %436 = vperm.xlu0 %435, %v366
  %v437 = vpop.permute.xlu0 %436
  %440 = vset.pattern.permute.xlu0 0
  %441 = vperm.xlu0 %440, %v367
  %v442 = vpop.permute.xlu0 %441
  %445 = vset.pattern.permute.xlu0 0
  %446 = vperm.xlu0 %445, %v368
  %v447 = vpop.permute.xlu0 %446
  %v449 = vadd.f32 %v305, %v372
  %v450 = vadd.f32 %v306, %v372
  %v451 = vadd.f32 %v307, %v372
  %v452 = vadd.f32 %v308, %v377
  %v453 = vadd.f32 %v309, %v377
  %v454 = vadd.f32 %v310, %v377
  %v455 = vadd.f32 %v311, %v382
  %v456 = vadd.f32 %v312, %v382
  %v457 = vadd.f32 %v313, %v382
  %v458 = vadd.f32 %v314, %v387
  %v459 = vadd.f32 %v315, %v387
  %v460 = vadd.f32 %v316, %v387
  %v461 = vadd.f32 %v317, %v392
  %v462 = vadd.f32 %v318, %v392
  %v463 = vadd.f32 %v319, %v392
  %v464 = vadd.f32 %v320, %v397
  %v465 = vadd.f32 %v321, %v397
  %v466 = vadd.f32 %v322, %v397
  %v467 = vadd.f32 %v323, %v402
  %v468 = vadd.f32 %v324, %v402
  %v469 = vadd.f32 %v325, %v402
  %v470 = vadd.f32 %v326, %v407
  %v471 = vadd.f32 %v327, %v407
  %v472 = vadd.f32 %v328, %v407
  %v473 = vadd.f32 %v329, %v412
  %v474 = vadd.f32 %v330, %v412
  %v475 = vadd.f32 %v331, %v412
  %v476 = vadd.f32 %v332, %v417
  %v477 = vadd.f32 %v333, %v417
  %v478 = vadd.f32 %v334, %v417
  %v479 = vadd.f32 %v335, %v422
  %v480 = vadd.f32 %v336, %v422
  %v481 = vadd.f32 %v337, %v422
  %v482 = vadd.f32 %v338, %v427
  %v483 = vadd.f32 %v339, %v427
  %v484 = vadd.f32 %v340, %v427
  %v485 = vadd.f32 %v341, %v432
  %v486 = vadd.f32 %v342, %v432
  %v487 = vadd.f32 %v343, %v432
  %v488 = vadd.f32 %v344, %v437
  %v489 = vadd.f32 %v345, %v437
  %v490 = vadd.f32 %v346, %v437
  %v491 = vadd.f32 %v347, %v442
  %v492 = vadd.f32 %v348, %v442
  %v493 = vadd.f32 %v349, %v442
  %v494 = vadd.f32 %v350, %v447
  %v495 = vadd.f32 %v351, %v447
  %v496 = vadd.f32 %v352, %v447
  %vm497 = vcmp.gt.f32.partialorder %v449, 0.0
  %vm498 = vcmp.gt.f32.partialorder %v450, 0.0
  %vm499 = vcmp.gt.f32.partialorder %v451, 0.0
  %vm500 = vcmp.gt.f32.partialorder %v452, 0.0
  %vm501 = vcmp.gt.f32.partialorder %v453, 0.0
  %vm502 = vcmp.gt.f32.partialorder %v454, 0.0
  %vm503 = vcmp.gt.f32.partialorder %v455, 0.0
  %vm504 = vcmp.gt.f32.partialorder %v456, 0.0
  %vm505 = vcmp.gt.f32.partialorder %v457, 0.0
  %vm506 = vcmp.gt.f32.partialorder %v458, 0.0
  %vm507 = vcmp.gt.f32.partialorder %v459, 0.0
  %vm508 = vcmp.gt.f32.partialorder %v460, 0.0
  %vm509 = vcmp.gt.f32.partialorder %v461, 0.0
  %vm510 = vcmp.gt.f32.partialorder %v462, 0.0
  %vm511 = vcmp.gt.f32.partialorder %v463, 0.0
  %vm512 = vcmp.gt.f32.partialorder %v464, 0.0
  %vm513 = vcmp.gt.f32.partialorder %v465, 0.0
  %vm514 = vcmp.gt.f32.partialorder %v466, 0.0
  %vm515 = vcmp.gt.f32.partialorder %v467, 0.0
  %vm516 = vcmp.gt.f32.partialorder %v468, 0.0
  %vm517 = vcmp.gt.f32.partialorder %v469, 0.0
  %vm518 = vcmp.gt.f32.partialorder %v470, 0.0
  %vm519 = vcmp.gt.f32.partialorder %v471, 0.0
  %vm520 = vcmp.gt.f32.partialorder %v472, 0.0
  %vm521 = vcmp.gt.f32.partialorder %v473, 0.0
  %vm522 = vcmp.gt.f32.partialorder %v474, 0.0
  %vm523 = vcmp.gt.f32.partialorder %v475, 0.0
  %vm524 = vcmp.gt.f32.partialorder %v476, 0.0
  %vm525 = vcmp.gt.f32.partialorder %v477, 0.0
  %vm526 = vcmp.gt.f32.partialorder %v478, 0.0
  %vm527 = vcmp.gt.f32.partialorder %v479, 0.0
  %vm528 = vcmp.gt.f32.partialorder %v480, 0.0
  %vm529 = vcmp.gt.f32.partialorder %v481, 0.0
  %vm530 = vcmp.gt.f32.partialorder %v482, 0.0
  %vm531 = vcmp.gt.f32.partialorder %v483, 0.0
  %vm532 = vcmp.gt.f32.partialorder %v484, 0.0
  %vm533 = vcmp.gt.f32.partialorder %v485, 0.0
  %vm534 = vcmp.gt.f32.partialorder %v486, 0.0
  %vm535 = vcmp.gt.f32.partialorder %v487, 0.0
  %vm536 = vcmp.gt.f32.partialorder %v488, 0.0
  %vm537 = vcmp.gt.f32.partialorder %v489, 0.0
  %vm538 = vcmp.gt.f32.partialorder %v490, 0.0
  %vm539 = vcmp.gt.f32.partialorder %v491, 0.0
  %vm540 = vcmp.gt.f32.partialorder %v492, 0.0
  %vm541 = vcmp.gt.f32.partialorder %v493, 0.0
  %vm542 = vcmp.gt.f32.partialorder %v494, 0.0
  %vm543 = vcmp.gt.f32.partialorder %v495, 0.0
  %vm544 = vcmp.gt.f32.partialorder %v496, 0.0
  %v545 = vmul.f32 %v449, 0.01
  %v546 = vmul.f32 %v450, 0.01
  %v547 = vmul.f32 %v451, 0.01
  %v548 = vmul.f32 %v452, 0.01
  %v549 = vmul.f32 %v453, 0.01
  %v550 = vmul.f32 %v454, 0.01
  %v551 = vmul.f32 %v455, 0.01
  %v552 = vmul.f32 %v456, 0.01
  %v553 = vmul.f32 %v457, 0.01
  %v554 = vmul.f32 %v458, 0.01
  %v555 = vmul.f32 %v459, 0.01
  %v556 = vmul.f32 %v460, 0.01
  %v557 = vmul.f32 %v461, 0.01
  %v558 = vmul.f32 %v462, 0.01
  %v559 = vmul.f32 %v463, 0.01
  %v560 = vmul.f32 %v464, 0.01
  %v561 = vmul.f32 %v465, 0.01
  %v562 = vmul.f32 %v466, 0.01
  %v563 = vmul.f32 %v467, 0.01
  %v564 = vmul.f32 %v468, 0.01
  %v565 = vmul.f32 %v469, 0.01
  %v566 = vmul.f32 %v470, 0.01
  %v567 = vmul.f32 %v471, 0.01
  %v568 = vmul.f32 %v472, 0.01
  %v569 = vmul.f32 %v473, 0.01
  %v570 = vmul.f32 %v474, 0.01
  %v571 = vmul.f32 %v475, 0.01
  %v572 = vmul.f32 %v476, 0.01
  %v573 = vmul.f32 %v477, 0.01
  %v574 = vmul.f32 %v478, 0.01
  %v575 = vmul.f32 %v479, 0.01
  %v576 = vmul.f32 %v480, 0.01
  %v577 = vmul.f32 %v481, 0.01
  %v578 = vmul.f32 %v482, 0.01
  %v579 = vmul.f32 %v483, 0.01
  %v580 = vmul.f32 %v484, 0.01
  %v581 = vmul.f32 %v485, 0.01
  %v582 = vmul.f32 %v486, 0.01
  %v583 = vmul.f32 %v487, 0.01
  %v584 = vmul.f32 %v488, 0.01
  %v585 = vmul.f32 %v489, 0.01
  %v586 = vmul.f32 %v490, 0.01
  %v587 = vmul.f32 %v491, 0.01
  %v588 = vmul.f32 %v492, 0.01
  %v589 = vmul.f32 %v493, 0.01
  %v590 = vmul.f32 %v494, 0.01
  %v591 = vmul.f32 %v495, 0.01
  %v592 = vmul.f32 %v496, 0.01
  %v593 = vsel %vm497, %v449, %v545
  %v594 = vsel %vm498, %v450, %v546
  %v595 = vsel %vm499, %v451, %v547
  %v596 = vsel %vm500, %v452, %v548
  %v597 = vsel %vm501, %v453, %v549
  %v598 = vsel %vm502, %v454, %v550
  %v599 = vsel %vm503, %v455, %v551
  %v600 = vsel %vm504, %v456, %v552
  %v601 = vsel %vm505, %v457, %v553
  %v602 = vsel %vm506, %v458, %v554
  %v603 = vsel %vm507, %v459, %v555
  %v604 = vsel %vm508, %v460, %v556
  %v605 = vsel %vm509, %v461, %v557
  %v606 = vsel %vm510, %v462, %v558
  %v607 = vsel %vm511, %v463, %v559
  %v608 = vsel %vm512, %v464, %v560
  %v609 = vsel %vm513, %v465, %v561
  %v610 = vsel %vm514, %v466, %v562
  %v611 = vsel %vm515, %v467, %v563
  %v612 = vsel %vm516, %v468, %v564
  %v613 = vsel %vm517, %v469, %v565
  %v614 = vsel %vm518, %v470, %v566
  %v615 = vsel %vm519, %v471, %v567
  %v616 = vsel %vm520, %v472, %v568
  %v617 = vsel %vm521, %v473, %v569
  %v618 = vsel %vm522, %v474, %v570
  %v619 = vsel %vm523, %v475, %v571
  %v620 = vsel %vm524, %v476, %v572
  %v621 = vsel %vm525, %v477, %v573
  %v622 = vsel %vm526, %v478, %v574
  %v623 = vsel %vm527, %v479, %v575
  %v624 = vsel %vm528, %v480, %v576
  %v625 = vsel %vm529, %v481, %v577
  %v626 = vsel %vm530, %v482, %v578
  %v627 = vsel %vm531, %v483, %v579
  %v628 = vsel %vm532, %v484, %v580
  %v629 = vsel %vm533, %v485, %v581
  %v630 = vsel %vm534, %v486, %v582
  %v631 = vsel %vm535, %v487, %v583
  %v632 = vsel %vm536, %v488, %v584
  %v633 = vsel %vm537, %v489, %v585
  %v634 = vsel %vm538, %v490, %v586
  %v635 = vsel %vm539, %v491, %v587
  %v636 = vsel %vm540, %v492, %v588
  %v637 = vsel %vm541, %v493, %v589
  %v638 = vsel %vm542, %v494, %v590
  %v639 = vsel %vm543, %v495, %v591
  %v640 = vsel %vm544, %v496, %v592
  %v641 = vld [vmem:[%s3] sm:$0xff]
  %v642 = vld [vmem:[%s3 + $0x8] sm:$0xff]
  %v643 = vld [vmem:[%s3 + $0x10] sm:$0xff]
  %v644 = vld [vmem:[%s3 + $0x18] sm:$0xff]
  %v645 = vld [vmem:[%s3 + $0x20] sm:$0xff]
  %v646 = vld [vmem:[%s3 + $0x28] sm:$0xff]
  %v647 = vld [vmem:[%s3 + $0x30] sm:$0xff]
  %v648 = vld [vmem:[%s3 + $0x38] sm:$0xff]
  %v649 = vld [vmem:[%s3 + $0x40] sm:$0xff]
  %v650 = vld [vmem:[%s3 + $0x48] sm:$0xff]
  %v651 = vld [vmem:[%s3 + $0x50] sm:$0xff]
  %v652 = vld [vmem:[%s3 + $0x58] sm:$0xff]
  %v653 = vld [vmem:[%s3 + $0x60] sm:$0xff]
  %v654 = vld [vmem:[%s3 + $0x68] sm:$0xff]
  %v655 = vld [vmem:[%s3 + $0x70] sm:$0xff]
  %v656 = vld [vmem:[%s3 + $0x78] sm:$0xff]
  %v657 = vld [vmem:[%s4] sm:$0xff]
  %v658 = vld [vmem:[%s4 + $0x8] sm:$0xff]
  %v659 = vld [vmem:[%s4 + $0x10] sm:$0xff]
  %v660 = vld [vmem:[%s4 + $0x18] sm:$0xff]
  %v661 = vld [vmem:[%s4 + $0x20] sm:$0xff]
  %v662 = vld [vmem:[%s4 + $0x28] sm:$0xff]
  %v663 = vld [vmem:[%s4 + $0x30] sm:$0xff]
  %v664 = vld [vmem:[%s4 + $0x38] sm:$0xff]
  %v665 = vld [vmem:[%s4 + $0x40] sm:$0xff]
  %v666 = vld [vmem:[%s4 + $0x48] sm:$0xff]
  %v667 = vld [vmem:[%s4 + $0x50] sm:$0xff]
  %v668 = vld [vmem:[%s4 + $0x58] sm:$0xff]
  %v669 = vld [vmem:[%s4 + $0x60] sm:$0xff]
  %v670 = vld [vmem:[%s4 + $0x68] sm:$0xff]
  %v671 = vld [vmem:[%s4 + $0x70] sm:$0xff]
  %v672 = vld [vmem:[%s4 + $0x78] sm:$0xff]
  %674 = vset.pattern.permute.xlu0 0
  %675 = vperm.xlu0 %674, %v657
  %v676 = vpop.permute.xlu0 %675
  %679 = vset.pattern.permute.xlu0 0
  %680 = vperm.xlu0 %679, %v658
  %v681 = vpop.permute.xlu0 %680
  %684 = vset.pattern.permute.xlu0 0
  %685 = vperm.xlu0 %684, %v659
  %v686 = vpop.permute.xlu0 %685
  %689 = vset.pattern.permute.xlu0 0
  %690 = vperm.xlu0 %689, %v660
  %v691 = vpop.permute.xlu0 %690
  %694 = vset.pattern.permute.xlu0 0
  %695 = vperm.xlu0 %694, %v661
  %v696 = vpop.permute.xlu0 %695
  %699 = vset.pattern.permute.xlu0 0
  %700 = vperm.xlu0 %699, %v662
  %v701 = vpop.permute.xlu0 %700
  %704 = vset.pattern.permute.xlu0 0
  %705 = vperm.xlu0 %704, %v663
  %v706 = vpop.permute.xlu0 %705
  %709 = vset.pattern.permute.xlu0 0
  %710 = vperm.xlu0 %709, %v664
  %v711 = vpop.permute.xlu0 %710
  %714 = vset.pattern.permute.xlu0 0
  %715 = vperm.xlu0 %714, %v665
  %v716 = vpop.permute.xlu0 %715
  %719 = vset.pattern.permute.xlu0 0
  %720 = vperm.xlu0 %719, %v666
  %v721 = vpop.permute.xlu0 %720
  %724 = vset.pattern.permute.xlu0 0
  %725 = vperm.xlu0 %724, %v667
  %v726 = vpop.permute.xlu0 %725
  %729 = vset.pattern.permute.xlu0 0
  %730 = vperm.xlu0 %729, %v668
  %v731 = vpop.permute.xlu0 %730
  %734 = vset.pattern.permute.xlu0 0
  %735 = vperm.xlu0 %734, %v669
  %v736 = vpop.permute.xlu0 %735
  %739 = vset.pattern.permute.xlu0 0
  %740 = vperm.xlu0 %739, %v670
  %v741 = vpop.permute.xlu0 %740
  %744 = vset.pattern.permute.xlu0 0
  %745 = vperm.xlu0 %744, %v671
  %v746 = vpop.permute.xlu0 %745
  %749 = vset.pattern.permute.xlu0 0
  %750 = vperm.xlu0 %749, %v672
  %v751 = vpop.permute.xlu0 %750
  %753 = vmatpush.msra.mxu0 %v638
  %754 = vmatpush.msra.mxu0 %v635
  %755 = vmatpush.msra.mxu0 %v632
  %756 = vmatpush.msra.mxu0 %v629
  %757 = vmatpush.msra.mxu0 %v626
  %758 = vmatpush.msra.mxu0 %v623
  %759 = vmatpush.msra.mxu0 %v620
  %760 = vmatpush.msra.mxu0 %v617
  %761 = vmatpush.msra.mxu0 %v614
  %762 = vmatpush.msra.mxu0 %v611
  %763 = vmatpush.msra.mxu0 %v608
  %764 = vmatpush.msra.mxu0 %v605
  %765 = vmatpush.msra.mxu0 %v602
  %766 = vmatpush.msra.mxu0 %v599
  %767 = vmatpush.msra.mxu0 %v596
  %768 = vmatpush.msra.mxu0 %v593
  %769 = vmatmul.f32.gmra.mxu0 %v641
  %v770 = vpop.f32.mrf.mxu0
  %v771 = vadd.f32 %v676, %v770
  %772 = vmatmul.f32.gmra.mxu0 %v642
  %v773 = vpop.f32.mrf.mxu0
  %v774 = vadd.f32 %v681, %v773
  %775 = vmatmul.f32.gmra.mxu0 %v643
  %v776 = vpop.f32.mrf.mxu0
  %v777 = vadd.f32 %v686, %v776
  %778 = vmatmul.f32.gmra.mxu0 %v644
  %v779 = vpop.f32.mrf.mxu0
  %v780 = vadd.f32 %v691, %v779
  %781 = vmatmul.f32.gmra.mxu0 %v645
  %v782 = vpop.f32.mrf.mxu0
  %v783 = vadd.f32 %v696, %v782
  %784 = vmatmul.f32.gmra.mxu0 %v646
  %v785 = vpop.f32.mrf.mxu0
  %v786 = vadd.f32 %v701, %v785
  %787 = vmatmul.f32.gmra.mxu0 %v647
  %v788 = vpop.f32.mrf.mxu0
  %v789 = vadd.f32 %v706, %v788
  %790 = vmatmul.f32.gmra.mxu0 %v648
  %v791 = vpop.f32.mrf.mxu0
  %v792 = vadd.f32 %v711, %v791
  %793 = vmatmul.f32.gmra.mxu0 %v649
  %v794 = vpop.f32.mrf.mxu0
  %v795 = vadd.f32 %v716, %v794
  %796 = vmatmul.f32.gmra.mxu0 %v650
  %v797 = vpop.f32.mrf.mxu0
  %v798 = vadd.f32 %v721, %v797
  %799 = vmatmul.f32.gmra.mxu0 %v651
  %v800 = vpop.f32.mrf.mxu0
  %v801 = vadd.f32 %v726, %v800
  %802 = vmatmul.f32.gmra.mxu0 %v652
  %v803 = vpop.f32.mrf.mxu0
  %v804 = vadd.f32 %v731, %v803
  %805 = vmatmul.f32.gmra.mxu0 %v653
  %v806 = vpop.f32.mrf.mxu0
  %v807 = vadd.f32 %v736, %v806
  %808 = vmatmul.f32.gmra.mxu0 %v654
  %v809 = vpop.f32.mrf.mxu0
  %v810 = vadd.f32 %v741, %v809
  %811 = vmatmul.f32.gmra.mxu0 %v655
  %v812 = vpop.f32.mrf.mxu0
  %v813 = vadd.f32 %v746, %v812
  %814 = vmatmul.f32.gmra.mxu0 %v656
  %v815 = vpop.f32.mrf.mxu0
  %v816 = vadd.f32 %v751, %v815
  %817 = vdwg.mxu0
  %818 = vmatpush.msra.mxu0 %v639
  %819 = vmatpush.msra.mxu0 %v636
  %820 = vmatpush.msra.mxu0 %v633
  %821 = vmatpush.msra.mxu0 %v630
  %822 = vmatpush.msra.mxu0 %v627
  %823 = vmatpush.msra.mxu0 %v624
  %824 = vmatpush.msra.mxu0 %v621
  %825 = vmatpush.msra.mxu0 %v618
  %826 = vmatpush.msra.mxu0 %v615
  %827 = vmatpush.msra.mxu0 %v612
  %828 = vmatpush.msra.mxu0 %v609
  %829 = vmatpush.msra.mxu0 %v606
  %830 = vmatpush.msra.mxu0 %v603
  %831 = vmatpush.msra.mxu0 %v600
  %832 = vmatpush.msra.mxu0 %v597
  %833 = vmatpush.msra.mxu0 %v594
  %834 = vmatmul.f32.gmra.mxu0 %v641
  %v835 = vpop.f32.mrf.mxu0
  %v836 = vadd.f32 %v676, %v835
  %837 = vmatmul.f32.gmra.mxu0 %v642
  %v838 = vpop.f32.mrf.mxu0
  %v839 = vadd.f32 %v681, %v838
  %840 = vmatmul.f32.gmra.mxu0 %v643
  %v841 = vpop.f32.mrf.mxu0
  %v842 = vadd.f32 %v686, %v841
  %843 = vmatmul.f32.gmra.mxu0 %v644
  %v844 = vpop.f32.mrf.mxu0
  %v845 = vadd.f32 %v691, %v844
  %846 = vmatmul.f32.gmra.mxu0 %v645
  %v847 = vpop.f32.mrf.mxu0
  %v848 = vadd.f32 %v696, %v847
  %849 = vmatmul.f32.gmra.mxu0 %v646
  %v850 = vpop.f32.mrf.mxu0
  %v851 = vadd.f32 %v701, %v850
  %852 = vmatmul.f32.gmra.mxu0 %v647
  %v853 = vpop.f32.mrf.mxu0
  %v854 = vadd.f32 %v706, %v853
  %855 = vmatmul.f32.gmra.mxu0 %v648
  %v856 = vpop.f32.mrf.mxu0
  %v857 = vadd.f32 %v711, %v856
  %858 = vmatmul.f32.gmra.mxu0 %v649
  %v859 = vpop.f32.mrf.mxu0
  %v860 = vadd.f32 %v716, %v859
  %861 = vmatmul.f32.gmra.mxu0 %v650
  %v862 = vpop.f32.mrf.mxu0
  %v863 = vadd.f32 %v721, %v862
  %864 = vmatmul.f32.gmra.mxu0 %v651
  %v865 = vpop.f32.mrf.mxu0
  %v866 = vadd.f32 %v726, %v865
  %867 = vmatmul.f32.gmra.mxu0 %v652
  %v868 = vpop.f32.mrf.mxu0
  %v869 = vadd.f32 %v731, %v868
  %870 = vmatmul.f32.gmra.mxu0 %v653
  %v871 = vpop.f32.mrf.mxu0
  %v872 = vadd.f32 %v736, %v871
  %873 = vmatmul.f32.gmra.mxu0 %v654
  %v874 = vpop.f32.mrf.mxu0
  %v875 = vadd.f32 %v741, %v874
  %876 = vmatmul.f32.gmra.mxu0 %v655
  %v877 = vpop.f32.mrf.mxu0
  %v878 = vadd.f32 %v746, %v877
  %879 = vmatmul.f32.gmra.mxu0 %v656
  %v880 = vpop.f32.mrf.mxu0
  %v881 = vadd.f32 %v751, %v880
  %882 = vdwg.mxu0
  %883 = vmatpush.msra.mxu0 %v640
  %884 = vmatpush.msra.mxu0 %v637
  %885 = vmatpush.msra.mxu0 %v634
  %886 = vmatpush.msra.mxu0 %v631
  %887 = vmatpush.msra.mxu0 %v628
  %888 = vmatpush.msra.mxu0 %v625
  %889 = vmatpush.msra.mxu0 %v622
  %890 = vmatpush.msra.mxu0 %v619
  %891 = vmatpush.msra.mxu0 %v616
  %892 = vmatpush.msra.mxu0 %v613
  %893 = vmatpush.msra.mxu0 %v610
  %894 = vmatpush.msra.mxu0 %v607
  %895 = vmatpush.msra.mxu0 %v604
  %896 = vmatpush.msra.mxu0 %v601
  %897 = vmatpush.msra.mxu0 %v598
  %898 = vmatpush.msra.mxu0 %v595
  %899 = vmatmul.f32.gmra.mxu0 %v641
  %v900 = vpop.f32.mrf.mxu0
  %v901 = vadd.f32 %v676, %v900
  %902 = vmatmul.f32.gmra.mxu0 %v642
  %v903 = vpop.f32.mrf.mxu0
  %v904 = vadd.f32 %v681, %v903
  %905 = vmatmul.f32.gmra.mxu0 %v643
  %v906 = vpop.f32.mrf.mxu0
  %v907 = vadd.f32 %v686, %v906
  %908 = vmatmul.f32.gmra.mxu0 %v644
  %v909 = vpop.f32.mrf.mxu0
  %v910 = vadd.f32 %v691, %v909
  %911 = vmatmul.f32.gmra.mxu0 %v645
  %v912 = vpop.f32.mrf.mxu0
  %v913 = vadd.f32 %v696, %v912
  %914 = vmatmul.f32.gmra.mxu0 %v646
  %v915 = vpop.f32.mrf.mxu0
  %v916 = vadd.f32 %v701, %v915
  %917 = vmatmul.f32.gmra.mxu0 %v647
  %v918 = vpop.f32.mrf.mxu0
  %v919 = vadd.f32 %v706, %v918
  %920 = vmatmul.f32.gmra.mxu0 %v648
  %v921 = vpop.f32.mrf.mxu0
  %v922 = vadd.f32 %v711, %v921
  %923 = vmatmul.f32.gmra.mxu0 %v649
  %v924 = vpop.f32.mrf.mxu0
  %v925 = vadd.f32 %v716, %v924
  %926 = vmatmul.f32.gmra.mxu0 %v650
  %v927 = vpop.f32.mrf.mxu0
  %v928 = vadd.f32 %v721, %v927
  %929 = vmatmul.f32.gmra.mxu0 %v651
  %v930 = vpop.f32.mrf.mxu0
  %v931 = vadd.f32 %v726, %v930
  %932 = vmatmul.f32.gmra.mxu0 %v652
  %v933 = vpop.f32.mrf.mxu0
  %v934 = vadd.f32 %v731, %v933
  %935 = vmatmul.f32.gmra.mxu0 %v653
  %v936 = vpop.f32.mrf.mxu0
  %v937 = vadd.f32 %v736, %v936
  %938 = vmatmul.f32.gmra.mxu0 %v654
  %v939 = vpop.f32.mrf.mxu0
  %v940 = vadd.f32 %v741, %v939
  %941 = vmatmul.f32.gmra.mxu0 %v655
  %v942 = vpop.f32.mrf.mxu0
  %v943 = vadd.f32 %v746, %v942
  %944 = vmatmul.f32.gmra.mxu0 %v656
  %v945 = vpop.f32.mrf.mxu0
  %v946 = vadd.f32 %v751, %v945
  %947 = vdwg.mxu0
  %vm948 = vcmp.gt.f32.partialorder %v771, 0.0
  %vm949 = vcmp.gt.f32.partialorder %v836, 0.0
  %vm950 = vcmp.gt.f32.partialorder %v901, 0.0
  %vm951 = vcmp.gt.f32.partialorder %v774, 0.0
  %vm952 = vcmp.gt.f32.partialorder %v839, 0.0
  %vm953 = vcmp.gt.f32.partialorder %v904, 0.0
  %vm954 = vcmp.gt.f32.partialorder %v777, 0.0
  %vm955 = vcmp.gt.f32.partialorder %v842, 0.0
  %vm956 = vcmp.gt.f32.partialorder %v907, 0.0
  %vm957 = vcmp.gt.f32.partialorder %v780, 0.0
  %vm958 = vcmp.gt.f32.partialorder %v845, 0.0
  %vm959 = vcmp.gt.f32.partialorder %v910, 0.0
  %vm960 = vcmp.gt.f32.partialorder %v783, 0.0
  %vm961 = vcmp.gt.f32.partialorder %v848, 0.0
  %vm962 = vcmp.gt.f32.partialorder %v913, 0.0
  %vm963 = vcmp.gt.f32.partialorder %v786, 0.0
  %vm964 = vcmp.gt.f32.partialorder %v851, 0.0
  %vm965 = vcmp.gt.f32.partialorder %v916, 0.0
  %vm966 = vcmp.gt.f32.partialorder %v789, 0.0
  %vm967 = vcmp.gt.f32.partialorder %v854, 0.0
  %vm968 = vcmp.gt.f32.partialorder %v919, 0.0
  %vm969 = vcmp.gt.f32.partialorder %v792, 0.0
  %vm970 = vcmp.gt.f32.partialorder %v857, 0.0
  %vm971 = vcmp.gt.f32.partialorder %v922, 0.0
  %vm972 = vcmp.gt.f32.partialorder %v795, 0.0
  %vm973 = vcmp.gt.f32.partialorder %v860, 0.0
  %vm974 = vcmp.gt.f32.partialorder %v925, 0.0
  %vm975 = vcmp.gt.f32.partialorder %v798, 0.0
  %vm976 = vcmp.gt.f32.partialorder %v863, 0.0
  %vm977 = vcmp.gt.f32.partialorder %v928, 0.0
  %vm978 = vcmp.gt.f32.partialorder %v801, 0.0
  %vm979 = vcmp.gt.f32.partialorder %v866, 0.0
  %vm980 = vcmp.gt.f32.partialorder %v931, 0.0
  %vm981 = vcmp.gt.f32.partialorder %v804, 0.0
  %vm982 = vcmp.gt.f32.partialorder %v869, 0.0
  %vm983 = vcmp.gt.f32.partialorder %v934, 0.0
  %vm984 = vcmp.gt.f32.partialorder %v807, 0.0
  %vm985 = vcmp.gt.f32.partialorder %v872, 0.0
  %vm986 = vcmp.gt.f32.partialorder %v937, 0.0
  %vm987 = vcmp.gt.f32.partialorder %v810, 0.0
  %vm988 = vcmp.gt.f32.partialorder %v875, 0.0
  %vm989 = vcmp.gt.f32.partialorder %v940, 0.0
  %vm990 = vcmp.gt.f32.partialorder %v813, 0.0
  %vm991 = vcmp.gt.f32.partialorder %v878, 0.0
  %vm992 = vcmp.gt.f32.partialorder %v943, 0.0
  %vm993 = vcmp.gt.f32.partialorder %v816, 0.0
  %vm994 = vcmp.gt.f32.partialorder %v881, 0.0
  %vm995 = vcmp.gt.f32.partialorder %v946, 0.0
  %v996 = vmul.f32 %v771, 0.01
  %v997 = vmul.f32 %v836, 0.01
  %v998 = vmul.f32 %v901, 0.01
  %v999 = vmul.f32 %v774, 0.01
  %v1000 = vmul.f32 %v839, 0.01
  %v1001 = vmul.f32 %v904, 0.01
  %v1002 = vmul.f32 %v777, 0.01
  %v1003 = vmul.f32 %v842, 0.01
  %v1004 = vmul.f32 %v907, 0.01
  %v1005 = vmul.f32 %v780, 0.01
  %v1006 = vmul.f32 %v845, 0.01
  %v1007 = vmul.f32 %v910, 0.01
  %v1008 = vmul.f32 %v783, 0.01
  %v1009 = vmul.f32 %v848, 0.01
  %v1010 = vmul.f32 %v913, 0.01
  %v1011 = vmul.f32 %v786, 0.01
  %v1012 = vmul.f32 %v851, 0.01
  %v1013 = vmul.f32 %v916, 0.01
  %v1014 = vmul.f32 %v789, 0.01
  %v1015 = vmul.f32 %v854, 0.01
  %v1016 = vmul.f32 %v919, 0.01
  %v1017 = vmul.f32 %v792, 0.01
  %v1018 = vmul.f32 %v857, 0.01
  %v1019 = vmul.f32 %v922, 0.01
  %v1020 = vmul.f32 %v795, 0.01
  %v1021 = vmul.f32 %v860, 0.01
  %v1022 = vmul.f32 %v925, 0.01
  %v1023 = vmul.f32 %v798, 0.01
  %v1024 = vmul.f32 %v863, 0.01
  %v1025 = vmul.f32 %v928, 0.01
  %v1026 = vmul.f32 %v801, 0.01
  %v1027 = vmul.f32 %v866, 0.01
  %v1028 = vmul.f32 %v931, 0.01
  %v1029 = vmul.f32 %v804, 0.01
  %v1030 = vmul.f32 %v869, 0.01
  %v1031 = vmul.f32 %v934, 0.01
  %v1032 = vmul.f32 %v807, 0.01
  %v1033 = vmul.f32 %v872, 0.01
  %v1034 = vmul.f32 %v937, 0.01
  %v1035 = vmul.f32 %v810, 0.01
  %v1036 = vmul.f32 %v875, 0.01
  %v1037 = vmul.f32 %v940, 0.01
  %v1038 = vmul.f32 %v813, 0.01
  %v1039 = vmul.f32 %v878, 0.01
  %v1040 = vmul.f32 %v943, 0.01
  %v1041 = vmul.f32 %v816, 0.01
  %v1042 = vmul.f32 %v881, 0.01
  %v1043 = vmul.f32 %v946, 0.01
  %v1044 = vsel %vm948, %v771, %v996
  %v1045 = vsel %vm949, %v836, %v997
  %v1046 = vsel %vm950, %v901, %v998
  %v1047 = vsel %vm951, %v774, %v999
  %v1048 = vsel %vm952, %v839, %v1000
  %v1049 = vsel %vm953, %v904, %v1001
  %v1050 = vsel %vm954, %v777, %v1002
  %v1051 = vsel %vm955, %v842, %v1003
  %v1052 = vsel %vm956, %v907, %v1004
  %v1053 = vsel %vm957, %v780, %v1005
  %v1054 = vsel %vm958, %v845, %v1006
  %v1055 = vsel %vm959, %v910, %v1007
  %v1056 = vsel %vm960, %v783, %v1008
  %v1057 = vsel %vm961, %v848, %v1009
  %v1058 = vsel %vm962, %v913, %v1010
  %v1059 = vsel %vm963, %v786, %v1011
  %v1060 = vsel %vm964, %v851, %v1012
  %v1061 = vsel %vm965, %v916, %v1013
  %v1062 = vsel %vm966, %v789, %v1014
  %v1063 = vsel %vm967, %v854, %v1015
  %v1064 = vsel %vm968, %v919, %v1016
  %v1065 = vsel %vm969, %v792, %v1017
  %v1066 = vsel %vm970, %v857, %v1018
  %v1067 = vsel %vm971, %v922, %v1019
  %v1068 = vsel %vm972, %v795, %v1020
  %v1069 = vsel %vm973, %v860, %v1021
  %v1070 = vsel %vm974, %v925, %v1022
  %v1071 = vsel %vm975, %v798, %v1023
  %v1072 = vsel %vm976, %v863, %v1024
  %v1073 = vsel %vm977, %v928, %v1025
  %v1074 = vsel %vm978, %v801, %v1026
  %v1075 = vsel %vm979, %v866, %v1027
  %v1076 = vsel %vm980, %v931, %v1028
  %v1077 = vsel %vm981, %v804, %v1029
  %v1078 = vsel %vm982, %v869, %v1030
  %v1079 = vsel %vm983, %v934, %v1031
  %v1080 = vsel %vm984, %v807, %v1032
  %v1081 = vsel %vm985, %v872, %v1033
  %v1082 = vsel %vm986, %v937, %v1034
  %v1083 = vsel %vm987, %v810, %v1035
  %v1084 = vsel %vm988, %v875, %v1036
  %v1085 = vsel %vm989, %v940, %v1037
  %v1086 = vsel %vm990, %v813, %v1038
  %v1087 = vsel %vm991, %v878, %v1039
  %v1088 = vsel %vm992, %v943, %v1040
  %v1089 = vsel %vm993, %v816, %v1041
  %v1090 = vsel %vm994, %v881, %v1042
  %v1091 = vsel %vm995, %v946, %v1043
  %v1092 = vld [vmem:[%s5] sm:$0xff]
  %v1093 = vld [vmem:[%s5 + $0x8] sm:$0xff]
  %v1094 = vld [vmem:[%s5 + $0x10] sm:$0xff]
  %v1095 = vld [vmem:[%s5 + $0x18] sm:$0xff]
  %v1096 = vld [vmem:[%s5 + $0x20] sm:$0xff]
  %v1097 = vld [vmem:[%s5 + $0x28] sm:$0xff]
  %v1098 = vld [vmem:[%s5 + $0x30] sm:$0xff]
  %v1099 = vld [vmem:[%s5 + $0x38] sm:$0xff]
  %v1100 = vld [vmem:[%s5 + $0x40] sm:$0xff]
  %v1101 = vld [vmem:[%s5 + $0x48] sm:$0xff]
  %v1102 = vld [vmem:[%s5 + $0x50] sm:$0xff]
  %v1103 = vld [vmem:[%s5 + $0x58] sm:$0xff]
  %v1104 = vld [vmem:[%s5 + $0x60] sm:$0xff]
  %v1105 = vld [vmem:[%s5 + $0x68] sm:$0xff]
  %v1106 = vld [vmem:[%s5 + $0x70] sm:$0xff]
  %v1107 = vld [vmem:[%s5 + $0x78] sm:$0xff]
  %v1108 = vld [vmem:[%s6] sm:$0xff]
  %v1109 = vld [vmem:[%s6 + $0x8] sm:$0xff]
  %v1110 = vld [vmem:[%s6 + $0x10] sm:$0xff]
  %v1111 = vld [vmem:[%s6 + $0x18] sm:$0xff]
  %v1112 = vld [vmem:[%s6 + $0x20] sm:$0xff]
  %v1113 = vld [vmem:[%s6 + $0x28] sm:$0xff]
  %v1114 = vld [vmem:[%s6 + $0x30] sm:$0xff]
  %v1115 = vld [vmem:[%s6 + $0x38] sm:$0xff]
  %v1116 = vld [vmem:[%s6 + $0x40] sm:$0xff]
  %v1117 = vld [vmem:[%s6 + $0x48] sm:$0xff]
  %v1118 = vld [vmem:[%s6 + $0x50] sm:$0xff]
  %v1119 = vld [vmem:[%s6 + $0x58] sm:$0xff]
  %v1120 = vld [vmem:[%s6 + $0x60] sm:$0xff]
  %v1121 = vld [vmem:[%s6 + $0x68] sm:$0xff]
  %v1122 = vld [vmem:[%s6 + $0x70] sm:$0xff]
  %v1123 = vld [vmem:[%s6 + $0x78] sm:$0xff]
  %1125 = vset.pattern.permute.xlu0 0
  %1126 = vperm.xlu0 %1125, %v1108
  %v1127 = vpop.permute.xlu0 %1126
  %1130 = vset.pattern.permute.xlu0 0
  %1131 = vperm.xlu0 %1130, %v1109
  %v1132 = vpop.permute.xlu0 %1131
  %1135 = vset.pattern.permute.xlu0 0
  %1136 = vperm.xlu0 %1135, %v1110
  %v1137 = vpop.permute.xlu0 %1136
  %1140 = vset.pattern.permute.xlu0 0
  %1141 = vperm.xlu0 %1140, %v1111
  %v1142 = vpop.permute.xlu0 %1141
  %1145 = vset.pattern.permute.xlu0 0
  %1146 = vperm.xlu0 %1145, %v1112
  %v1147 = vpop.permute.xlu0 %1146
  %1150 = vset.pattern.permute.xlu0 0
  %1151 = vperm.xlu0 %1150, %v1113
  %v1152 = vpop.permute.xlu0 %1151
  %1155 = vset.pattern.permute.xlu0 0
  %1156 = vperm.xlu0 %1155, %v1114
  %v1157 = vpop.permute.xlu0 %1156
  %1160 = vset.pattern.permute.xlu0 0
  %1161 = vperm.xlu0 %1160, %v1115
  %v1162 = vpop.permute.xlu0 %1161
  %1165 = vset.pattern.permute.xlu0 0
  %1166 = vperm.xlu0 %1165, %v1116
  %v1167 = vpop.permute.xlu0 %1166
  %1170 = vset.pattern.permute.xlu0 0
  %1171 = vperm.xlu0 %1170, %v1117
  %v1172 = vpop.permute.xlu0 %1171
  %1175 = vset.pattern.permute.xlu0 0
  %1176 = vperm.xlu0 %1175, %v1118
  %v1177 = vpop.permute.xlu0 %1176
  %1180 = vset.pattern.permute.xlu0 0
  %1181 = vperm.xlu0 %1180, %v1119
  %v1182 = vpop.permute.xlu0 %1181
  %1185 = vset.pattern.permute.xlu0 0
  %1186 = vperm.xlu0 %1185, %v1120
  %v1187 = vpop.permute.xlu0 %1186
  %1190 = vset.pattern.permute.xlu0 0
  %1191 = vperm.xlu0 %1190, %v1121
  %v1192 = vpop.permute.xlu0 %1191
  %1195 = vset.pattern.permute.xlu0 0
  %1196 = vperm.xlu0 %1195, %v1122
  %v1197 = vpop.permute.xlu0 %1196
  %1200 = vset.pattern.permute.xlu0 0
  %1201 = vperm.xlu0 %1200, %v1123
  %v1202 = vpop.permute.xlu0 %1201
  %1204 = vmatpush.msra.mxu0 %v1089
  %1205 = vmatpush.msra.mxu0 %v1086
  %1206 = vmatpush.msra.mxu0 %v1083
  %1207 = vmatpush.msra.mxu0 %v1080
  %1208 = vmatpush.msra.mxu0 %v1077
  %1209 = vmatpush.msra.mxu0 %v1074
  %1210 = vmatpush.msra.mxu0 %v1071
  %1211 = vmatpush.msra.mxu0 %v1068
  %1212 = vmatpush.msra.mxu0 %v1065
  %1213 = vmatpush.msra.mxu0 %v1062
  %1214 = vmatpush.msra.mxu0 %v1059
  %1215 = vmatpush.msra.mxu0 %v1056
  %1216 = vmatpush.msra.mxu0 %v1053
  %1217 = vmatpush.msra.mxu0 %v1050
  %1218 = vmatpush.msra.mxu0 %v1047
  %1219 = vmatpush.msra.mxu0 %v1044
  %1220 = vmatmul.f32.gmra.mxu0 %v1092
  %v1221 = vpop.f32.mrf.mxu0
  %v1222 = vadd.f32 %v1127, %v1221
  %1223 = vmatmul.f32.gmra.mxu0 %v1093
  %v1224 = vpop.f32.mrf.mxu0
  %v1225 = vadd.f32 %v1132, %v1224
  %1226 = vmatmul.f32.gmra.mxu0 %v1094
  %v1227 = vpop.f32.mrf.mxu0
  %v1228 = vadd.f32 %v1137, %v1227
  %1229 = vmatmul.f32.gmra.mxu0 %v1095
  %v1230 = vpop.f32.mrf.mxu0
  %v1231 = vadd.f32 %v1142, %v1230
  %1232 = vmatmul.f32.gmra.mxu0 %v1096
  %v1233 = vpop.f32.mrf.mxu0
  %v1234 = vadd.f32 %v1147, %v1233
  %1235 = vmatmul.f32.gmra.mxu0 %v1097
  %v1236 = vpop.f32.mrf.mxu0
  %v1237 = vadd.f32 %v1152, %v1236
  %1238 = vmatmul.f32.gmra.mxu0 %v1098
  %v1239 = vpop.f32.mrf.mxu0
  %v1240 = vadd.f32 %v1157, %v1239
  %1241 = vmatmul.f32.gmra.mxu0 %v1099
  %v1242 = vpop.f32.mrf.mxu0
  %v1243 = vadd.f32 %v1162, %v1242
  %1244 = vmatmul.f32.gmra.mxu0 %v1100
  %v1245 = vpop.f32.mrf.mxu0
  %v1246 = vadd.f32 %v1167, %v1245
  %1247 = vmatmul.f32.gmra.mxu0 %v1101
  %v1248 = vpop.f32.mrf.mxu0
  %v1249 = vadd.f32 %v1172, %v1248
  %1250 = vmatmul.f32.gmra.mxu0 %v1102
  %v1251 = vpop.f32.mrf.mxu0
  %v1252 = vadd.f32 %v1177, %v1251
  %1253 = vmatmul.f32.gmra.mxu0 %v1103
  %v1254 = vpop.f32.mrf.mxu0
  %v1255 = vadd.f32 %v1182, %v1254
  %1256 = vmatmul.f32.gmra.mxu0 %v1104
  %v1257 = vpop.f32.mrf.mxu0
  %v1258 = vadd.f32 %v1187, %v1257
  %1259 = vmatmul.f32.gmra.mxu0 %v1105
  %v1260 = vpop.f32.mrf.mxu0
  %v1261 = vadd.f32 %v1192, %v1260
  %1262 = vmatmul.f32.gmra.mxu0 %v1106
  %v1263 = vpop.f32.mrf.mxu0
  %v1264 = vadd.f32 %v1197, %v1263
  %1265 = vmatmul.f32.gmra.mxu0 %v1107
  %v1266 = vpop.f32.mrf.mxu0
  %v1267 = vadd.f32 %v1202, %v1266
  %1268 = vdwg.mxu0
  %1269 = vmatpush.msra.mxu0 %v1090
  %1270 = vmatpush.msra.mxu0 %v1087
  %1271 = vmatpush.msra.mxu0 %v1084
  %1272 = vmatpush.msra.mxu0 %v1081
  %1273 = vmatpush.msra.mxu0 %v1078
  %1274 = vmatpush.msra.mxu0 %v1075
  %1275 = vmatpush.msra.mxu0 %v1072
  %1276 = vmatpush.msra.mxu0 %v1069
  %1277 = vmatpush.msra.mxu0 %v1066
  %1278 = vmatpush.msra.mxu0 %v1063
  %1279 = vmatpush.msra.mxu0 %v1060
  %1280 = vmatpush.msra.mxu0 %v1057
  %1281 = vmatpush.msra.mxu0 %v1054
  %1282 = vmatpush.msra.mxu0 %v1051
  %1283 = vmatpush.msra.mxu0 %v1048
  %1284 = vmatpush.msra.mxu0 %v1045
  %1285 = vmatmul.f32.gmra.mxu0 %v1092
  %v1286 = vpop.f32.mrf.mxu0
  %v1287 = vadd.f32 %v1127, %v1286
  %1288 = vmatmul.f32.gmra.mxu0 %v1093
  %v1289 = vpop.f32.mrf.mxu0
  %v1290 = vadd.f32 %v1132, %v1289
  %1291 = vmatmul.f32.gmra.mxu0 %v1094
  %v1292 = vpop.f32.mrf.mxu0
  %v1293 = vadd.f32 %v1137, %v1292
  %1294 = vmatmul.f32.gmra.mxu0 %v1095
  %v1295 = vpop.f32.mrf.mxu0
  %v1296 = vadd.f32 %v1142, %v1295
  %1297 = vmatmul.f32.gmra.mxu0 %v1096
  %v1298 = vpop.f32.mrf.mxu0
  %v1299 = vadd.f32 %v1147, %v1298
  %1300 = vmatmul.f32.gmra.mxu0 %v1097
  %v1301 = vpop.f32.mrf.mxu0
  %v1302 = vadd.f32 %v1152, %v1301
  %1303 = vmatmul.f32.gmra.mxu0 %v1098
  %v1304 = vpop.f32.mrf.mxu0
  %v1305 = vadd.f32 %v1157, %v1304
  %1306 = vmatmul.f32.gmra.mxu0 %v1099
  %v1307 = vpop.f32.mrf.mxu0
  %v1308 = vadd.f32 %v1162, %v1307
  %1309 = vmatmul.f32.gmra.mxu0 %v1100
  %v1310 = vpop.f32.mrf.mxu0
  %v1311 = vadd.f32 %v1167, %v1310
  %1312 = vmatmul.f32.gmra.mxu0 %v1101
  %v1313 = vpop.f32.mrf.mxu0
  %v1314 = vadd.f32 %v1172, %v1313
  %1315 = vmatmul.f32.gmra.mxu0 %v1102
  %v1316 = vpop.f32.mrf.mxu0
  %v1317 = vadd.f32 %v1177, %v1316
  %1318 = vmatmul.f32.gmra.mxu0 %v1103
  %v1319 = vpop.f32.mrf.mxu0
  %v1320 = vadd.f32 %v1182, %v1319
  %1321 = vmatmul.f32.gmra.mxu0 %v1104
  %v1322 = vpop.f32.mrf.mxu0
  %v1323 = vadd.f32 %v1187, %v1322
  %1324 = vmatmul.f32.gmra.mxu0 %v1105
  %v1325 = vpop.f32.mrf.mxu0
  %v1326 = vadd.f32 %v1192, %v1325
  %1327 = vmatmul.f32.gmra.mxu0 %v1106
  %v1328 = vpop.f32.mrf.mxu0
  %v1329 = vadd.f32 %v1197, %v1328
  %1330 = vmatmul.f32.gmra.mxu0 %v1107
  %v1331 = vpop.f32.mrf.mxu0
  %v1332 = vadd.f32 %v1202, %v1331
  %1333 = vdwg.mxu0
  %1334 = vmatpush.msra.mxu0 %v1091
  %1335 = vmatpush.msra.mxu0 %v1088
  %1336 = vmatpush.msra.mxu0 %v1085
  %1337 = vmatpush.msra.mxu0 %v1082
  %1338 = vmatpush.msra.mxu0 %v1079
  %1339 = vmatpush.msra.mxu0 %v1076
  %1340 = vmatpush.msra.mxu0 %v1073
  %1341 = vmatpush.msra.mxu0 %v1070
  %1342 = vmatpush.msra.mxu0 %v1067
  %1343 = vmatpush.msra.mxu0 %v1064
  %1344 = vmatpush.msra.mxu0 %v1061
  %1345 = vmatpush.msra.mxu0 %v1058
  %1346 = vmatpush.msra.mxu0 %v1055
  %1347 = vmatpush.msra.mxu0 %v1052
  %1348 = vmatpush.msra.mxu0 %v1049
  %1349 = vmatpush.msra.mxu0 %v1046
  %1350 = vmatmul.f32.gmra.mxu0 %v1092
  %v1351 = vpop.f32.mrf.mxu0
  %v1352 = vadd.f32 %v1127, %v1351
  %1353 = vmatmul.f32.gmra.mxu0 %v1093
  %v1354 = vpop.f32.mrf.mxu0
  %v1355 = vadd.f32 %v1132, %v1354
  %1356 = vmatmul.f32.gmra.mxu0 %v1094
  %v1357 = vpop.f32.mrf.mxu0
  %v1358 = vadd.f32 %v1137, %v1357
  %1359 = vmatmul.f32.gmra.mxu0 %v1095
  %v1360 = vpop.f32.mrf.mxu0
  %v1361 = vadd.f32 %v1142, %v1360
  %1362 = vmatmul.f32.gmra.mxu0 %v1096
  %v1363 = vpop.f32.mrf.mxu0
  %v1364 = vadd.f32 %v1147, %v1363
  %1365 = vmatmul.f32.gmra.mxu0 %v1097
  %v1366 = vpop.f32.mrf.mxu0
  %v1367 = vadd.f32 %v1152, %v1366
  %1368 = vmatmul.f32.gmra.mxu0 %v1098
  %v1369 = vpop.f32.mrf.mxu0
  %v1370 = vadd.f32 %v1157, %v1369
  %1371 = vmatmul.f32.gmra.mxu0 %v1099
  %v1372 = vpop.f32.mrf.mxu0
  %v1373 = vadd.f32 %v1162, %v1372
  %1374 = vmatmul.f32.gmra.mxu0 %v1100
  %v1375 = vpop.f32.mrf.mxu0
  %v1376 = vadd.f32 %v1167, %v1375
  %1377 = vmatmul.f32.gmra.mxu0 %v1101
  %v1378 = vpop.f32.mrf.mxu0
  %v1379 = vadd.f32 %v1172, %v1378
  %1380 = vmatmul.f32.gmra.mxu0 %v1102
  %v1381 = vpop.f32.mrf.mxu0
  %v1382 = vadd.f32 %v1177, %v1381
  %1383 = vmatmul.f32.gmra.mxu0 %v1103
  %v1384 = vpop.f32.mrf.mxu0
  %v1385 = vadd.f32 %v1182, %v1384
  %1386 = vmatmul.f32.gmra.mxu0 %v1104
  %v1387 = vpop.f32.mrf.mxu0
  %v1388 = vadd.f32 %v1187, %v1387
  %1389 = vmatmul.f32.gmra.mxu0 %v1105
  %v1390 = vpop.f32.mrf.mxu0
  %v1391 = vadd.f32 %v1192, %v1390
  %1392 = vmatmul.f32.gmra.mxu0 %v1106
  %v1393 = vpop.f32.mrf.mxu0
  %v1394 = vadd.f32 %v1197, %v1393
  %1395 = vmatmul.f32.gmra.mxu0 %v1107
  %v1396 = vpop.f32.mrf.mxu0
  %v1397 = vadd.f32 %v1202, %v1396
  %1398 = vdwg.mxu0
  %vm1399 = vcmp.gt.f32.partialorder %v1222, 0.0
  %vm1400 = vcmp.gt.f32.partialorder %v1287, 0.0
  %vm1401 = vcmp.gt.f32.partialorder %v1352, 0.0
  %vm1402 = vcmp.gt.f32.partialorder %v1225, 0.0
  %vm1403 = vcmp.gt.f32.partialorder %v1290, 0.0
  %vm1404 = vcmp.gt.f32.partialorder %v1355, 0.0
  %vm1405 = vcmp.gt.f32.partialorder %v1228, 0.0
  %vm1406 = vcmp.gt.f32.partialorder %v1293, 0.0
  %vm1407 = vcmp.gt.f32.partialorder %v1358, 0.0
  %vm1408 = vcmp.gt.f32.partialorder %v1231, 0.0
  %vm1409 = vcmp.gt.f32.partialorder %v1296, 0.0
  %vm1410 = vcmp.gt.f32.partialorder %v1361, 0.0
  %vm1411 = vcmp.gt.f32.partialorder %v1234, 0.0
  %vm1412 = vcmp.gt.f32.partialorder %v1299, 0.0
  %vm1413 = vcmp.gt.f32.partialorder %v1364, 0.0
  %vm1414 = vcmp.gt.f32.partialorder %v1237, 0.0
  %vm1415 = vcmp.gt.f32.partialorder %v1302, 0.0
  %vm1416 = vcmp.gt.f32.partialorder %v1367, 0.0
  %vm1417 = vcmp.gt.f32.partialorder %v1240, 0.0
  %vm1418 = vcmp.gt.f32.partialorder %v1305, 0.0
  %vm1419 = vcmp.gt.f32.partialorder %v1370, 0.0
  %vm1420 = vcmp.gt.f32.partialorder %v1243, 0.0
  %vm1421 = vcmp.gt.f32.partialorder %v1308, 0.0
  %vm1422 = vcmp.gt.f32.partialorder %v1373, 0.0
  %vm1423 = vcmp.gt.f32.partialorder %v1246, 0.0
  %vm1424 = vcmp.gt.f32.partialorder %v1311, 0.0
  %vm1425 = vcmp.gt.f32.partialorder %v1376, 0.0
  %vm1426 = vcmp.gt.f32.partialorder %v1249, 0.0
  %vm1427 = vcmp.gt.f32.partialorder %v1314, 0.0
  %vm1428 = vcmp.gt.f32.partialorder %v1379, 0.0
  %vm1429 = vcmp.gt.f32.partialorder %v1252, 0.0
  %vm1430 = vcmp.gt.f32.partialorder %v1317, 0.0
  %vm1431 = vcmp.gt.f32.partialorder %v1382, 0.0
  %vm1432 = vcmp.gt.f32.partialorder %v1255, 0.0
  %vm1433 = vcmp.gt.f32.partialorder %v1320, 0.0
  %vm1434 = vcmp.gt.f32.partialorder %v1385, 0.0
  %vm1435 = vcmp.gt.f32.partialorder %v1258, 0.0
  %vm1436 = vcmp.gt.f32.partialorder %v1323, 0.0
  %vm1437 = vcmp.gt.f32.partialorder %v1388, 0.0
  %vm1438 = vcmp.gt.f32.partialorder %v1261, 0.0
  %vm1439 = vcmp.gt.f32.partialorder %v1326, 0.0
  %vm1440 = vcmp.gt.f32.partialorder %v1391, 0.0
  %vm1441 = vcmp.gt.f32.partialorder %v1264, 0.0
  %vm1442 = vcmp.gt.f32.partialorder %v1329, 0.0
  %vm1443 = vcmp.gt.f32.partialorder %v1394, 0.0
  %vm1444 = vcmp.gt.f32.partialorder %v1267, 0.0
  %vm1445 = vcmp.gt.f32.partialorder %v1332, 0.0
  %vm1446 = vcmp.gt.f32.partialorder %v1397, 0.0
  %v1447 = vmul.f32 %v1222, 0.01
  %v1448 = vmul.f32 %v1287, 0.01
  %v1449 = vmul.f32 %v1352, 0.01
  %v1450 = vmul.f32 %v1225, 0.01
  %v1451 = vmul.f32 %v1290, 0.01
  %v1452 = vmul.f32 %v1355, 0.01
  %v1453 = vmul.f32 %v1228, 0.01
  %v1454 = vmul.f32 %v1293, 0.01
  %v1455 = vmul.f32 %v1358, 0.01
  %v1456 = vmul.f32 %v1231, 0.01
  %v1457 = vmul.f32 %v1296, 0.01
  %v1458 = vmul.f32 %v1361, 0.01
  %v1459 = vmul.f32 %v1234, 0.01
  %v1460 = vmul.f32 %v1299, 0.01
  %v1461 = vmul.f32 %v1364, 0.01
  %v1462 = vmul.f32 %v1237, 0.01
  %v1463 = vmul.f32 %v1302, 0.01
  %v1464 = vmul.f32 %v1367, 0.01
  %v1465 = vmul.f32 %v1240, 0.01
  %v1466 = vmul.f32 %v1305, 0.01
  %v1467 = vmul.f32 %v1370, 0.01
  %v1468 = vmul.f32 %v1243, 0.01
  %v1469 = vmul.f32 %v1308, 0.01
  %v1470 = vmul.f32 %v1373, 0.01
  %v1471 = vmul.f32 %v1246, 0.01
  %v1472 = vmul.f32 %v1311, 0.01
  %v1473 = vmul.f32 %v1376, 0.01
  %v1474 = vmul.f32 %v1249, 0.01
  %v1475 = vmul.f32 %v1314, 0.01
  %v1476 = vmul.f32 %v1379, 0.01
  %v1477 = vmul.f32 %v1252, 0.01
  %v1478 = vmul.f32 %v1317, 0.01
  %v1479 = vmul.f32 %v1382, 0.01
  %v1480 = vmul.f32 %v1255, 0.01
  %v1481 = vmul.f32 %v1320, 0.01
  %v1482 = vmul.f32 %v1385, 0.01
  %v1483 = vmul.f32 %v1258, 0.01
  %v1484 = vmul.f32 %v1323, 0.01
  %v1485 = vmul.f32 %v1388, 0.01
  %v1486 = vmul.f32 %v1261, 0.01
  %v1487 = vmul.f32 %v1326, 0.01
  %v1488 = vmul.f32 %v1391, 0.01
  %v1489 = vmul.f32 %v1264, 0.01
  %v1490 = vmul.f32 %v1329, 0.01
  %v1491 = vmul.f32 %v1394, 0.01
  %v1492 = vmul.f32 %v1267, 0.01
  %v1493 = vmul.f32 %v1332, 0.01
  %v1494 = vmul.f32 %v1397, 0.01
  %v1495 = vsel %vm1399, %v1222, %v1447
  %v1496 = vsel %vm1400, %v1287, %v1448
  %v1497 = vsel %vm1401, %v1352, %v1449
  %v1498 = vsel %vm1402, %v1225, %v1450
  %v1499 = vsel %vm1403, %v1290, %v1451
  %v1500 = vsel %vm1404, %v1355, %v1452
  %v1501 = vsel %vm1405, %v1228, %v1453
  %v1502 = vsel %vm1406, %v1293, %v1454
  %v1503 = vsel %vm1407, %v1358, %v1455
  %v1504 = vsel %vm1408, %v1231, %v1456
  %v1505 = vsel %vm1409, %v1296, %v1457
  %v1506 = vsel %vm1410, %v1361, %v1458
  %v1507 = vsel %vm1411, %v1234, %v1459
  %v1508 = vsel %vm1412, %v1299, %v1460
  %v1509 = vsel %vm1413, %v1364, %v1461
  %v1510 = vsel %vm1414, %v1237, %v1462
  %v1511 = vsel %vm1415, %v1302, %v1463
  %v1512 = vsel %vm1416, %v1367, %v1464
  %v1513 = vsel %vm1417, %v1240, %v1465
  %v1514 = vsel %vm1418, %v1305, %v1466
  %v1515 = vsel %vm1419, %v1370, %v1467
  %v1516 = vsel %vm1420, %v1243, %v1468
  %v1517 = vsel %vm1421, %v1308, %v1469
  %v1518 = vsel %vm1422, %v1373, %v1470
  %v1519 = vsel %vm1423, %v1246, %v1471
  %v1520 = vsel %vm1424, %v1311, %v1472
  %v1521 = vsel %vm1425, %v1376, %v1473
  %v1522 = vsel %vm1426, %v1249, %v1474
  %v1523 = vsel %vm1427, %v1314, %v1475
  %v1524 = vsel %vm1428, %v1379, %v1476
  %v1525 = vsel %vm1429, %v1252, %v1477
  %v1526 = vsel %vm1430, %v1317, %v1478
  %v1527 = vsel %vm1431, %v1382, %v1479
  %v1528 = vsel %vm1432, %v1255, %v1480
  %v1529 = vsel %vm1433, %v1320, %v1481
  %v1530 = vsel %vm1434, %v1385, %v1482
  %v1531 = vsel %vm1435, %v1258, %v1483
  %v1532 = vsel %vm1436, %v1323, %v1484
  %v1533 = vsel %vm1437, %v1388, %v1485
  %v1534 = vsel %vm1438, %v1261, %v1486
  %v1535 = vsel %vm1439, %v1326, %v1487
  %v1536 = vsel %vm1440, %v1391, %v1488
  %v1537 = vsel %vm1441, %v1264, %v1489
  %v1538 = vsel %vm1442, %v1329, %v1490
  %v1539 = vsel %vm1443, %v1394, %v1491
  %v1540 = vsel %vm1444, %v1267, %v1492
  %v1541 = vsel %vm1445, %v1332, %v1493
  %v1542 = vsel %vm1446, %v1397, %v1494
  %v1543 = vld [vmem:[%s7] sm:$0xff]
  %v1544 = vld [vmem:[%s8] sm:$0xff]
  %1546 = vset.pattern.permute.xlu0 0
  %1547 = vperm.xlu0 %1546, %v1544
  %v1548 = vpop.permute.xlu0 %1547
  %1550 = vmatpush.msra.mxu0 %v1540
  %1551 = vmatpush.msra.mxu0 %v1537
  %1552 = vmatpush.msra.mxu0 %v1534
  %1553 = vmatpush.msra.mxu0 %v1531
  %1554 = vmatpush.msra.mxu0 %v1528
  %1555 = vmatpush.msra.mxu0 %v1525
  %1556 = vmatpush.msra.mxu0 %v1522
  %1557 = vmatpush.msra.mxu0 %v1519
  %1558 = vmatpush.msra.mxu0 %v1516
  %1559 = vmatpush.msra.mxu0 %v1513
  %1560 = vmatpush.msra.mxu0 %v1510
  %1561 = vmatpush.msra.mxu0 %v1507
  %1562 = vmatpush.msra.mxu0 %v1504
  %1563 = vmatpush.msra.mxu0 %v1501
  %1564 = vmatpush.msra.mxu0 %v1498
  %1565 = vmatpush.msra.mxu0 %v1495
  %1566 = vmatmul.f32.gmra.mxu0 %v1543
  %v1567 = vpop.f32.mrf.mxu0
  %v1568 = vadd.f32 %v1548, %v1567
  %1569 = vdwg.mxu0
  %1570 = vmatpush.msra.mxu0 %v1541
  %1571 = vmatpush.msra.mxu0 %v1538
  %1572 = vmatpush.msra.mxu0 %v1535
  %1573 = vmatpush.msra.mxu0 %v1532
  %1574 = vmatpush.msra.mxu0 %v1529
  %1575 = vmatpush.msra.mxu0 %v1526
  %1576 = vmatpush.msra.mxu0 %v1523
  %1577 = vmatpush.msra.mxu0 %v1520
  %1578 = vmatpush.msra.mxu0 %v1517
  %1579 = vmatpush.msra.mxu0 %v1514
  %1580 = vmatpush.msra.mxu0 %v1511
  %1581 = vmatpush.msra.mxu0 %v1508
  %1582 = vmatpush.msra.mxu0 %v1505
  %1583 = vmatpush.msra.mxu0 %v1502
  %1584 = vmatpush.msra.mxu0 %v1499
  %1585 = vmatpush.msra.mxu0 %v1496
  %1586 = vmatmul.f32.gmra.mxu0 %v1543
  %v1587 = vpop.f32.mrf.mxu0
  %v1588 = vadd.f32 %v1548, %v1587
  %1589 = vdwg.mxu0
  %1590 = vmatpush.msra.mxu0 %v1542
  %1591 = vmatpush.msra.mxu0 %v1539
  %1592 = vmatpush.msra.mxu0 %v1536
  %1593 = vmatpush.msra.mxu0 %v1533
  %1594 = vmatpush.msra.mxu0 %v1530
  %1595 = vmatpush.msra.mxu0 %v1527
  %1596 = vmatpush.msra.mxu0 %v1524
  %1597 = vmatpush.msra.mxu0 %v1521
  %1598 = vmatpush.msra.mxu0 %v1518
  %1599 = vmatpush.msra.mxu0 %v1515
  %1600 = vmatpush.msra.mxu0 %v1512
  %1601 = vmatpush.msra.mxu0 %v1509
  %1602 = vmatpush.msra.mxu0 %v1506
  %1603 = vmatpush.msra.mxu0 %v1503
  %1604 = vmatpush.msra.mxu0 %v1500
  %1605 = vmatpush.msra.mxu0 %v1497
  %1606 = vmatmul.f32.gmra.mxu0 %v1543
  %v1607 = vpop.f32.mrf.mxu0
  %v1608 = vadd.f32 %v1548, %v1607
  %1609 = vdwg.mxu0
  %v1613 = vrot.slane %v1588, 7
  %v1614 = vrot.slane %v1608, 6
  %vm1615 = vcmask 1040384
  %v1616 = vsel %vm1615, %v1568, %v1613
  %vm1617 = vcmask 1041408
  %v1618 = vsel %vm1617, %v1616, %v1614
  %v1620 = vlaneseq
  %vm1621 = vcmp.ge.s32.totalorder %v1620, 0
  %vm1622 = vcmp.lt.s32.totalorder %v1620, 384
  %vm1623 = vmand %vm1621, %vm1622
  %1624 = vst.msk [vmem:[%s9] sm:$0x7] %vm1623, %v1618
  // Predicated region
  $region38: #{_forward_impl.1} parent=0 // pred_check
    _
  $region39: #{_forward_impl.1} parent=0 // pred_check_branch
    %1626 = sbr.rel (0) target = $region41
  $region40: #{_forward_impl.1} parent=0 // pred_region
    _
  $region41: #{_forward_impl.1} parent=0 // pred_fallthru
    _
  // Predicated region
  $region42: #{_forward_impl.1} parent=0 // pred_check
    _
  $region43: #{_forward_impl.1} parent=0 // pred_check_branch
    %1628 = sbr.rel (0) target = $region45
  $region44: #{_forward_impl.1} parent=0 // pred_region
    _
  $region45: #{_forward_impl.1} parent=0 // pred_fallthru
    _

</llo_original>
